<compile_context>
chip_gen: v6e
topology: v6e:2x2x1
jax: 0.10.0
libtpu: 0.0.40
codegen_flags: <defaults>
</compile_context>

<pallas_src>
from functools import partial

import jax
import jax.numpy as jnp
from jax.experimental import pallas as pl
from jax.experimental.pallas import tpu as pltpu

# ---------------- model hyper-parameters (small, synthetic) ----------------
SEQ_LEN = 8
BATCH = 2
NUM_NODES = 16
INPUT_DIM = 4
NUM_UNITS = 32
MAX_DIFFUSION_STEP = 2
EPS = 0.3
NUM_MATRICES = MAX_DIFFUSION_STEP + 1
INPUT_SIZE = INPUT_DIM + NUM_UNITS          # concat([inputs, state], dim=-1)

HIGHEST = jax.lax.Precision.HIGHEST


def _mm(a, b):
    return jnp.dot(a, b, preferred_element_type=jnp.float32)


def _sigmoid(x):
    # one EUP op, no exp overflow, no VALU divide
    return 0.5 * (jnp.tanh(0.5 * x) + 1.0)


# ---------------------------- Pallas kernel --------------------------------
def fagru_seq_kernel(h0_ref, adj_ref, w1r_ref, w1u_ref, w2_ref,
                     gx1r_ref, gx1u_ref, gx2_ref, out_ref, h_ref):
    """One FA-GRU recurrence step per grid index t (grid axis is the time axis).

    h0_ref  : (B*N, U)        f32  initial hidden state (resident, read at t==0)
    adj_ref : (N, N)          f32  FA-normalized, transposed adjacency (resident)
    w1r_ref : (Kp1, U, U)     f32  reset-gate hidden-path weights per order (resident)
    w1u_ref : (Kp1, U, U)     f32  update-gate hidden-path weights per order (resident)
    w2_ref  : (Kp1, U, U)     f32  candidate hidden-path weights per order (resident)
    gx1r_ref: (B*N, U)        f32  precomputed x-path + bias for r gate (streamed per t)
    gx1u_ref: (B*N, U)        f32  precomputed x-path + bias for u gate (streamed per t)
    gx2_ref : (B*N, U)        f32  precomputed x-path + bias for candidate (streamed)
    out_ref : (B*N, U)        f32  hidden state after step t (block t of (T, B*N, U))
    h_ref   : (B*N, U)        f32  VMEM scratch carrying h across grid steps
    """
    t = pl.program_id(0)

    @pl.when(t == 0)
    def _init():
        h_ref[...] = h0_ref[...]

    adj = adj_ref[...]                                   # (N, N)
    h = h_ref[...]                                       # (B*N, U)
    n = NUM_NODES
    nb = h.shape[0] // n                                 # batch folded into rows (b, n)

    def diffuse(x):
        # A @ x per batch block; row slices are sublane-aligned (N multiple of 8),
        # so no block-diagonal kron adjacency and no structural-zero MACs.
        return jnp.concatenate(
            [_mm(adj, x[b * n:(b + 1) * n, :]) for b in range(nb)], axis=0)

    def cheb(t0):
        # Chebyshev diffusion list [T_0 .. T_K], T_k = 2 A T_{k-1} - T_{k-2}
        ts = [t0]
        if MAX_DIFFUSION_STEP >= 1:
            t1 = diffuse(t0)
            ts.append(t1)
            tkm2, tkm1 = t0, t1
            for _ in range(2, MAX_DIFFUSION_STEP + 1):
                tk = 2.0 * diffuse(tkm1) - tkm2
                ts.append(tk)
                tkm2, tkm1 = tkm1, tk
        return ts

    def project(ts, w_ref, gx):
        # per-order accumulating matmuls: no lane concat, f32 accumulate
        acc = gx
        for k in range(NUM_MATRICES):
            acc = acc + _mm(ts[k], w_ref[k])
        return acc

    th = cheb(h)
    r = _sigmoid(project(th, w1r_ref, gx1r_ref[...]))    # (B*N, U)
    u = _sigmoid(project(th, w1u_ref, gx1u_ref[...]))    # (B*N, U)

    trh = cheb(r * h)
    c = jnp.tanh(project(trh, w2_ref, gx2_ref[...]))     # (B*N, U)

    h_new = u * h + (1.0 - u) * c
    h_ref[...] = h_new
    out_ref[...] = h_new


# ------------------------------- glue ---------------------------------------
def frequency_adaption_matrix(adj, beta, eps):
    """Plain-JAX port of _calculate_frequency_adaption_matrix(adj).t()."""
    nn = adj.shape[0]
    eye = jnp.eye(nn, dtype=jnp.float32)
    a = adj + eye
    d = jnp.sum(a, axis=1)
    d_inv = 1.0 / d
    d_inv = jnp.where(jnp.isinf(d_inv), 0.0, d_inv)
    d_sqrt_inv = jnp.sqrt(d_inv)
    norm = d_sqrt_inv[:, None] * a * d_sqrt_inv[None, :]   # diag(s) @ A @ diag(s)
    lf = eps * eye + norm
    hf = eps * eye - norm
    return (beta * lf + (1.0 - beta) * hf).T


def split_gconv_weight(w, out_dim):
    """Split a torch gconv weight (rows indexed s*Kp1 + k) into per-order stacks:
    wx[k] : (Din, O) input-feature rows,  wh[k] : (U, O) hidden-state rows."""
    w3 = w.reshape(INPUT_SIZE, NUM_MATRICES, out_dim)       # [s, k, O]
    wx = jnp.transpose(w3[:INPUT_DIM], (1, 0, 2))           # (Kp1, Din, O)
    wh = jnp.transpose(w3[INPUT_DIM:], (1, 0, 2))           # (Kp1, U,   O)
    return wx, wh


@jax.jit
def fagru_sequence(inputs_seq, hx0, adj, beta, w1, b1, w2, b2):
    """Run FAGRUCell for T steps in a single pallas_call.

    inputs_seq: (T, B, N*Din) f32, hx0: (B, N*U) f32, adj: (N, N) f32
    returns   : (T, B, N*U)   f32 (hidden state after each step; step semantics match
                 FAGRUCell.forward exactly, so out[0] is the single-step module output)
    """
    T, B = inputs_seq.shape[0], inputs_seq.shape[1]
    N, Din, U = NUM_NODES, INPUT_DIM, NUM_UNITS

    # --- once-per-sequence preprocessing (O(N^2) adjacency, weight re-layout) ---
    adj_fa = frequency_adaption_matrix(adj, beta, EPS)          # (N, N), already .T

    w1x, w1h = split_gconv_weight(w1, 2 * U)
    w2x, w2h = split_gconv_weight(w2, U)
    w1hr, w1hu = w1h[..., :U], w1h[..., U:]                     # (Kp1, U, U) each

    # --- non-recurrent x path for all timesteps (hoisted out of the step kernel) ---
    xs = inputs_seq.reshape(T, B, N, Din).astype(jnp.float32)
    terms = [xs]
    if MAX_DIFFUSION_STEP >= 1:
        t1 = jnp.einsum('nm,tbmd->tbnd', adj_fa, xs, precision=HIGHEST)
        terms.append(t1)
        tkm2, tkm1 = xs, t1
        for _ in range(2, MAX_DIFFUSION_STEP + 1):
            tk = 2.0 * jnp.einsum('nm,tbmd->tbnd', adj_fa, tkm1, precision=HIGHEST) - tkm2
            terms.append(tk)
            tkm2, tkm1 = tkm1, tk

    def xproj(wx, bias, odim):
        acc = jnp.broadcast_to(bias.astype(jnp.float32), (T, B, N, odim))
        for k in range(NUM_MATRICES):
            acc = acc + jnp.einsum('tbnd,do->tbno', terms[k], wx[k], precision=HIGHEST)
        return acc.reshape(T, B * N, odim)

    gx1 = xproj(w1x, b1, 2 * U)                                 # biases folded in
    gx2 = xproj(w2x, b2, U)
    gx1r, gx1u = gx1[..., :U], gx1[..., U:]                     # (T, B*N, U) each

    h0 = hx0.reshape(B * N, U).astype(jnp.float32)

    out = pl.pallas_call(
        fagru_seq_kernel,
        out_shape=jax.ShapeDtypeStruct((T, B * N, U), jnp.float32),
        grid=(T,),
        in_specs=[
            pl.BlockSpec((B * N, U), lambda t: (0, 0)),                  # h0   (resident)
            pl.BlockSpec((N, N), lambda t: (0, 0)),                      # adj  (resident)
            pl.BlockSpec((NUM_MATRICES, U, U), lambda t: (0, 0, 0)),     # w1hr (resident)
            pl.BlockSpec((NUM_MATRICES, U, U), lambda t: (0, 0, 0)),     # w1hu (resident)
            pl.BlockSpec((NUM_MATRICES, U, U), lambda t: (0, 0, 0)),     # w2h  (resident)
            pl.BlockSpec((None, B * N, U), lambda t: (t, 0, 0)),         # gx1r (per step)
            pl.BlockSpec((None, B * N, U), lambda t: (t, 0, 0)),         # gx1u (per step)
            pl.BlockSpec((None, B * N, U), lambda t: (t, 0, 0)),         # gx2  (per step)
        ],
        out_specs=pl.BlockSpec((None, B * N, U), lambda t: (t, 0, 0)),
        scratch_shapes=[pltpu.VMEM((B * N, U), jnp.float32)],            # carried h
        compiler_params=pltpu.CompilerParams(
            dimension_semantics=("arbitrary",)),                         # serial recurrence
    )(h0, adj_fa, w1hr, w1hu, w2h, gx1r, gx1u, gx2)

    # rows are (b, n); (B*N, U) and (B, N*U) are the same row-major data.
    return out.reshape(T, B, N * U)


# --------------------- pure-JAX reference (torch port) ----------------------
def reference_forward(inputs, hx, adj, beta, w1, b1, w2, b2):
    B = inputs.shape[0]
    N, U, K = NUM_NODES, NUM_UNITS, MAX_DIFFUSION_STEP
    adj_mx = frequency_adaption_matrix(adj, beta, EPS)

    def gconv(inp, state, W, bias):
        x = jnp.concatenate([inp.reshape(B, N, -1), state.reshape(B, N, -1)], axis=2)
        S = x.shape[2]
        x0 = jnp.transpose(x, (1, 2, 0)).reshape(N, S * B)
        xs = [x0]
        if K > 0:
            x1 = jnp.dot(adj_mx, x0, precision=HIGHEST)
            xs.append(x1)
            xkm1, xk = x0, x1
            for _ in range(2, K + 1):
                xk1 = 2.0 * jnp.dot(adj_mx, xk, precision=HIGHEST) - xkm1
                xs.append(xk1)
                xkm1, xk = xk, xk1
        xcat = jnp.stack(xs, axis=0).reshape(K + 1, N, S, B)
        xcat = jnp.transpose(xcat, (3, 1, 2, 0)).reshape(B * N, S * (K + 1))
        out = jnp.dot(xcat, W, precision=HIGHEST) + bias
        return out.reshape(B, N * W.shape[1])

    value = 1.0 / (1.0 + jnp.exp(-gconv(inputs, hx, w1, b1)))
    value = value.reshape(B, N, 2 * U)
    r = value[:, :, :U].reshape(B, N * U)
    u = value[:, :, U:].reshape(B, N * U)
    c = jnp.tanh(gconv(inputs, r * hx, w2, b2))
    return u * hx + (1.0 - u) * c


# ------------------------------- main ----------------------------------------
def xavier_normal(key, shape):
    fan_in, fan_out = shape
    std = (2.0 / (fan_in + fan_out)) ** 0.5
    return std * jax.random.normal(key, shape, dtype=jnp.float32)


if __name__ == "__main__":
    key = jax.random.PRNGKey(0)
    k_adj, k_in, k_h, k_w1, k_w2 = jax.random.split(key, 5)

    # random binary adjacency without self-loops (forward adds I itself)
    adj = (jax.random.uniform(k_adj, (NUM_NODES, NUM_NODES)) > 0.6).astype(jnp.float32)
    adj = adj * (1.0 - jnp.eye(NUM_NODES, dtype=jnp.float32))

    inputs_seq = jax.random.normal(
        k_in, (SEQ_LEN, BATCH, NUM_NODES * INPUT_DIM), dtype=jnp.float32)
    hx0 = jax.random.normal(k_h, (BATCH, NUM_NODES * NUM_UNITS), dtype=jnp.float32)

    beta = jnp.float32(0.8)                                   # _fagcn_beta init
    # gconv weights: (input_size * num_matrices, output_size), xavier_normal init
    w1 = xavier_normal(k_w1, (INPUT_SIZE * NUM_MATRICES, 2 * NUM_UNITS))
    b1 = jnp.full((2 * NUM_UNITS,), 1.0, dtype=jnp.float32)   # bias_start=1.0 (r/u gates)
    w2 = xavier_normal(k_w2, (INPUT_SIZE * NUM_MATRICES, NUM_UNITS))
    b2 = jnp.zeros((NUM_UNITS,), dtype=jnp.float32)           # bias_start=0.0 (candidate)

    # Pallas: the whole T-step recurrence in a single kernel launch.
    out_seq = jax.block_until_ready(
        fagru_sequence(inputs_seq, hx0, adj, beta, w1, b1, w2, b2))
    assert out_seq.shape == (SEQ_LEN, BATCH, NUM_NODES * NUM_UNITS)

    # Pure-JAX reference: iterate the original cell step-by-step.
    ref_step = jax.jit(reference_forward)
    h = hx0
    ref_steps = []
    for t in range(SEQ_LEN):
        h = ref_step(inputs_seq[t], h, adj, beta, w1, b1, w2, b2)
        ref_steps.append(h)
    ref_seq = jax.block_until_ready(jnp.stack(ref_steps, axis=0))

    err = float(jnp.max(jnp.abs(out_seq - ref_seq)))
    assert err < 2e-3, f"kernel/reference mismatch: max abs err = {err}"

    print("KERNEL_OK")
</pallas_src>

<mosaic_0001>
module attributes {stable_mosaic.version = 11 : i64} {
  func.func @fagru_seq_kernel(%arg0: i32, %arg1: memref<32x32xf32, #tpu.memory_space<vmem>>, %arg2: memref<16x16xf32, #tpu.memory_space<vmem>>, %arg3: memref<3x32x32xf32, #tpu.memory_space<vmem>>, %arg4: memref<3x32x32xf32, #tpu.memory_space<vmem>>, %arg5: memref<3x32x32xf32, #tpu.memory_space<vmem>>, %arg6: memref<1x32x32xf32, #tpu.memory_space<vmem>>, %arg7: memref<1x32x32xf32, #tpu.memory_space<vmem>>, %arg8: memref<1x32x32xf32, #tpu.memory_space<vmem>>, %arg9: memref<1x32x32xf32, #tpu.memory_space<vmem>>, %arg10: memref<32x32xf32, #tpu.memory_space<vmem>>) attributes {dimension_semantics = [#tpu.dimension_semantics<arbitrary>], iteration_bounds = array<i64: 8>, scalar_prefetch = 0 : i64, scratch_operands = 1 : i64, tpu.core_type = #tpu.core_type<tc>, window_params = [{pipeline_mode = #tpu.pipeline_mode<synchronous>, transform_indices = @transform_0, window_bounds = array<i64: 32, 32>}, {pipeline_mode = #tpu.pipeline_mode<synchronous>, transform_indices = @transform_1, window_bounds = array<i64: 16, 16>}, {pipeline_mode = #tpu.pipeline_mode<synchronous>, transform_indices = @transform_2, window_bounds = array<i64: 3, 32, 32>}, {pipeline_mode = #tpu.pipeline_mode<synchronous>, transform_indices = @transform_3, window_bounds = array<i64: 3, 32, 32>}, {pipeline_mode = #tpu.pipeline_mode<synchronous>, transform_indices = @transform_4, window_bounds = array<i64: 3, 32, 32>}, {transform_indices = @transform_5, window_bounds = array<i64: 1, 32, 32>}, {transform_indices = @transform_6, window_bounds = array<i64: 1, 32, 32>}, {transform_indices = @transform_7, window_bounds = array<i64: 1, 32, 32>}, {transform_indices = @transform_8, window_bounds = array<i64: 1, 32, 32>}]} {
    %c0_i32 = arith.constant 0 : i32
    %0 = arith.cmpi eq, %arg0, %c0_i32 : i32
    %1 = arith.extui %0 : i1 to i32
    %c0_i32_0 = arith.constant 0 : i32
    %2 = arith.cmpi ne, %1, %c0_i32_0 : i32
    scf.if %2 {
      %c0_68 = arith.constant 0 : index
      %c0_69 = arith.constant 0 : index
      %98 = vector.load %arg1[%c0_68, %c0_69] : memref<32x32xf32, #tpu.memory_space<vmem>>, vector<32x32xf32>
      %c0_70 = arith.constant 0 : index
      %c0_71 = arith.constant 0 : index
      %99 = vector.load %arg10[%c0_70, %c0_71] : memref<32x32xf32, #tpu.memory_space<vmem>>, vector<32x32xf32>
      tpu.vector_store %arg10[%c0_70, %c0_71], %98 {strides = array<i32>} : memref<32x32xf32, #tpu.memory_space<vmem>>, vector<32x32xf32>,
    } else {
    }
    %c0 = arith.constant 0 : index
    %c0_1 = arith.constant 0 : index
    %3 = vector.load %arg2[%c0, %c0_1] : memref<16x16xf32, #tpu.memory_space<vmem>>, vector<16x16xf32>
    %c0_2 = arith.constant 0 : index
    %c0_3 = arith.constant 0 : index
    %4 = vector.load %arg10[%c0_2, %c0_3] : memref<32x32xf32, #tpu.memory_space<vmem>>, vector<32x32xf32>
    %5 = vector.extract_strided_slice %4 {offsets = [0, 0], sizes = [16, 32], strides = [1, 1]} : vector<32x32xf32> to vector<16x32xf32>
    %cst = arith.constant dense<0.000000e+00> : vector<16x32xf32>
    %6 = tpu.matmul %3, %5, %cst {dimension_numbers = #tpu.dot_dimension_numbers<[1], [0], [0], [1], [0, 0, 1, 1], [], []>} : vector<16x16xf32>, vector<16x32xf32>, vector<16x32xf32> -> vector<16x32xf32>
    %7 = vector.extract_strided_slice %4 {offsets = [16, 0], sizes = [16, 32], strides = [1, 1]} : vector<32x32xf32> to vector<16x32xf32>
    %cst_4 = arith.constant dense<0.000000e+00> : vector<16x32xf32>
    %8 = tpu.matmul %3, %7, %cst_4 {dimension_numbers = #tpu.dot_dimension_numbers<[1], [0], [0], [1], [0, 0, 1, 1], [], []>} : vector<16x16xf32>, vector<16x32xf32>, vector<16x32xf32> -> vector<16x32xf32>
    %9 = tpu.concatenate %6, %8 in 0 : vector<16x32xf32>, vector<16x32xf32> -> vector<32x32xf32>
    %10 = vector.extract_strided_slice %9 {offsets = [0, 0], sizes = [16, 32], strides = [1, 1]} : vector<32x32xf32> to vector<16x32xf32>
    %cst_5 = arith.constant dense<0.000000e+00> : vector<16x32xf32>
    %11 = tpu.matmul %3, %10, %cst_5 {dimension_numbers = #tpu.dot_dimension_numbers<[1], [0], [0], [1], [0, 0, 1, 1], [], []>} : vector<16x16xf32>, vector<16x32xf32>, vector<16x32xf32> -> vector<16x32xf32>
    %12 = vector.extract_strided_slice %9 {offsets = [16, 0], sizes = [16, 32], strides = [1, 1]} : vector<32x32xf32> to vector<16x32xf32>
    %cst_6 = arith.constant dense<0.000000e+00> : vector<16x32xf32>
    %13 = tpu.matmul %3, %12, %cst_6 {dimension_numbers = #tpu.dot_dimension_numbers<[1], [0], [0], [1], [0, 0, 1, 1], [], []>} : vector<16x16xf32>, vector<16x32xf32>, vector<16x32xf32> -> vector<16x32xf32>
    %14 = tpu.concatenate %11, %13 in 0 : vector<16x32xf32>, vector<16x32xf32> -> vector<32x32xf32>
    %cst_7 = arith.constant 2.000000e+00 : f32
    %15 = vector.broadcast %cst_7 : f32 to vector<32x32xf32>
    %16 = arith.mulf %15, %14 : vector<32x32xf32>
    %17 = arith.subf %16, %4 : vector<32x32xf32>
    %c0_8 = arith.constant 0 : index
    %c0_9 = arith.constant 0 : index
    %c0_10 = arith.constant 0 : index
    %18 = vector.load %arg6[%c0_8, %c0_9, %c0_10] : memref<1x32x32xf32, #tpu.memory_space<vmem>>, vector<1x32x32xf32>
    %19 = vector.shape_cast %18 : vector<1x32x32xf32> to vector<32x32xf32>
    %c0_11 = arith.constant 0 : index
    %c0_12 = arith.constant 0 : index
    %c0_13 = arith.constant 0 : index
    %20 = vector.load %arg3[%c0_11, %c0_12, %c0_13] : memref<3x32x32xf32, #tpu.memory_space<vmem>>, vector<1x32x32xf32>
    %21 = vector.shape_cast %20 : vector<1x32x32xf32> to vector<32x32xf32>
    %cst_14 = arith.constant dense<0.000000e+00> : vector<32x32xf32>
    %22 = tpu.matmul %4, %21, %cst_14 {dimension_numbers = #tpu.dot_dimension_numbers<[1], [0], [0], [1], [0, 0, 1, 1], [], []>} : vector<32x32xf32>, vector<32x32xf32>, vector<32x32xf32> -> vector<32x32xf32>
    %23 = arith.addf %19, %22 : vector<32x32xf32>
    %c1 = arith.constant 1 : index
    %c0_15 = arith.constant 0 : index
    %c0_16 = arith.constant 0 : index
    %24 = vector.load %arg3[%c1, %c0_15, %c0_16] : memref<3x32x32xf32, #tpu.memory_space<vmem>>, vector<1x32x32xf32>
    %25 = vector.shape_cast %24 : vector<1x32x32xf32> to vector<32x32xf32>
    %cst_17 = arith.constant dense<0.000000e+00> : vector<32x32xf32>
    %26 = tpu.matmul %9, %25, %cst_17 {dimension_numbers = #tpu.dot_dimension_numbers<[1], [0], [0], [1], [0, 0, 1, 1], [], []>} : vector<32x32xf32>, vector<32x32xf32>, vector<32x32xf32> -> vector<32x32xf32>
    %27 = arith.addf %23, %26 : vector<32x32xf32>
    %c2 = arith.constant 2 : index
    %c0_18 = arith.constant 0 : index
    %c0_19 = arith.constant 0 : index
    %28 = vector.load %arg3[%c2, %c0_18, %c0_19] : memref<3x32x32xf32, #tpu.memory_space<vmem>>, vector<1x32x32xf32>
    %29 = vector.shape_cast %28 : vector<1x32x32xf32> to vector<32x32xf32>
    %cst_20 = arith.constant dense<0.000000e+00> : vector<32x32xf32>
    %30 = tpu.matmul %17, %29, %cst_20 {dimension_numbers = #tpu.dot_dimension_numbers<[1], [0], [0], [1], [0, 0, 1, 1], [], []>} : vector<32x32xf32>, vector<32x32xf32>, vector<32x32xf32> -> vector<32x32xf32>
    %31 = arith.addf %27, %30 : vector<32x32xf32>
    %cst_21 = arith.constant 5.000000e-01 : f32
    %32 = vector.broadcast %cst_21 : f32 to vector<32x32xf32>
    %33 = arith.mulf %32, %31 : vector<32x32xf32>
    %34 = math.tanh %33 : vector<32x32xf32>
    %cst_22 = arith.constant 1.000000e+00 : f32
    %35 = vector.broadcast %cst_22 : f32 to vector<32x32xf32>
    %36 = arith.addf %34, %35 : vector<32x32xf32>
    %cst_23 = arith.constant 5.000000e-01 : f32
    %37 = vector.broadcast %cst_23 : f32 to vector<32x32xf32>
    %38 = arith.mulf %37, %36 : vector<32x32xf32>
    %c0_24 = arith.constant 0 : index
    %c0_25 = arith.constant 0 : index
    %c0_26 = arith.constant 0 : index
    %39 = vector.load %arg7[%c0_24, %c0_25, %c0_26] : memref<1x32x32xf32, #tpu.memory_space<vmem>>, vector<1x32x32xf32>
    %40 = vector.shape_cast %39 : vector<1x32x32xf32> to vector<32x32xf32>
    %c0_27 = arith.constant 0 : index
    %c0_28 = arith.constant 0 : index
    %c0_29 = arith.constant 0 : index
    %41 = vector.load %arg4[%c0_27, %c0_28, %c0_29] : memref<3x32x32xf32, #tpu.memory_space<vmem>>, vector<1x32x32xf32>
    %42 = vector.shape_cast %41 : vector<1x32x32xf32> to vector<32x32xf32>
    %cst_30 = arith.constant dense<0.000000e+00> : vector<32x32xf32>
    %43 = tpu.matmul %4, %42, %cst_30 {dimension_numbers = #tpu.dot_dimension_numbers<[1], [0], [0], [1], [0, 0, 1, 1], [], []>} : vector<32x32xf32>, vector<32x32xf32>, vector<32x32xf32> -> vector<32x32xf32>
    %44 = arith.addf %40, %43 : vector<32x32xf32>
    %c1_31 = arith.constant 1 : index
    %c0_32 = arith.constant 0 : index
    %c0_33 = arith.constant 0 : index
    %45 = vector.load %arg4[%c1_31, %c0_32, %c0_33] : memref<3x32x32xf32, #tpu.memory_space<vmem>>, vector<1x32x32xf32>
    %46 = vector.shape_cast %45 : vector<1x32x32xf32> to vector<32x32xf32>
    %cst_34 = arith.constant dense<0.000000e+00> : vector<32x32xf32>
    %47 = tpu.matmul %9, %46, %cst_34 {dimension_numbers = #tpu.dot_dimension_numbers<[1], [0], [0], [1], [0, 0, 1, 1], [], []>} : vector<32x32xf32>, vector<32x32xf32>, vector<32x32xf32> -> vector<32x32xf32>
    %48 = arith.addf %44, %47 : vector<32x32xf32>
    %c2_35 = arith.constant 2 : index
    %c0_36 = arith.constant 0 : index
    %c0_37 = arith.constant 0 : index
    %49 = vector.load %arg4[%c2_35, %c0_36, %c0_37] : memref<3x32x32xf32, #tpu.memory_space<vmem>>, vector<1x32x32xf32>
    %50 = vector.shape_cast %49 : vector<1x32x32xf32> to vector<32x32xf32>
    %cst_38 = arith.constant dense<0.000000e+00> : vector<32x32xf32>
    %51 = tpu.matmul %17, %50, %cst_38 {dimension_numbers = #tpu.dot_dimension_numbers<[1], [0], [0], [1], [0, 0, 1, 1], [], []>} : vector<32x32xf32>, vector<32x32xf32>, vector<32x32xf32> -> vector<32x32xf32>
    %52 = arith.addf %48, %51 : vector<32x32xf32>
    %cst_39 = arith.constant 5.000000e-01 : f32
    %53 = vector.broadcast %cst_39 : f32 to vector<32x32xf32>
    %54 = arith.mulf %53, %52 : vector<32x32xf32>
    %55 = math.tanh %54 : vector<32x32xf32>
    %cst_40 = arith.constant 1.000000e+00 : f32
    %56 = vector.broadcast %cst_40 : f32 to vector<32x32xf32>
    %57 = arith.addf %55, %56 : vector<32x32xf32>
    %cst_41 = arith.constant 5.000000e-01 : f32
    %58 = vector.broadcast %cst_41 : f32 to vector<32x32xf32>
    %59 = arith.mulf %58, %57 : vector<32x32xf32>
    %60 = arith.mulf %38, %4 : vector<32x32xf32>
    %61 = vector.extract_strided_slice %60 {offsets = [0, 0], sizes = [16, 32], strides = [1, 1]} : vector<32x32xf32> to vector<16x32xf32>
    %cst_42 = arith.constant dense<0.000000e+00> : vector<16x32xf32>
    %62 = tpu.matmul %3, %61, %cst_42 {dimension_numbers = #tpu.dot_dimension_numbers<[1], [0], [0], [1], [0, 0, 1, 1], [], []>} : vector<16x16xf32>, vector<16x32xf32>, vector<16x32xf32> -> vector<16x32xf32>
    %63 = vector.extract_strided_slice %60 {offsets = [16, 0], sizes = [16, 32], strides = [1, 1]} : vector<32x32xf32> to vector<16x32xf32>
    %cst_43 = arith.constant dense<0.000000e+00> : vector<16x32xf32>
    %64 = tpu.matmul %3, %63, %cst_43 {dimension_numbers = #tpu.dot_dimension_numbers<[1], [0], [0], [1], [0, 0, 1, 1], [], []>} : vector<16x16xf32>, vector<16x32xf32>, vector<16x32xf32> -> vector<16x32xf32>
    %65 = tpu.concatenate %62, %64 in 0 : vector<16x32xf32>, vector<16x32xf32> -> vector<32x32xf32>
    %66 = vector.extract_strided_slice %65 {offsets = [0, 0], sizes = [16, 32], strides = [1, 1]} : vector<32x32xf32> to vector<16x32xf32>
    %cst_44 = arith.constant dense<0.000000e+00> : vector<16x32xf32>
    %67 = tpu.matmul %3, %66, %cst_44 {dimension_numbers = #tpu.dot_dimension_numbers<[1], [0], [0], [1], [0, 0, 1, 1], [], []>} : vector<16x16xf32>, vector<16x32xf32>, vector<16x32xf32> -> vector<16x32xf32>
    %68 = vector.extract_strided_slice %65 {offsets = [16, 0], sizes = [16, 32], strides = [1, 1]} : vector<32x32xf32> to vector<16x32xf32>
    %cst_45 = arith.constant dense<0.000000e+00> : vector<16x32xf32>
    %69 = tpu.matmul %3, %68, %cst_45 {dimension_numbers = #tpu.dot_dimension_numbers<[1], [0], [0], [1], [0, 0, 1, 1], [], []>} : vector<16x16xf32>, vector<16x32xf32>, vector<16x32xf32> -> vector<16x32xf32>
    %70 = tpu.concatenate %67, %69 in 0 : vector<16x32xf32>, vector<16x32xf32> -> vector<32x32xf32>
    %cst_46 = arith.constant 2.000000e+00 : f32
    %71 = vector.broadcast %cst_46 : f32 to vector<32x32xf32>
    %72 = arith.mulf %71, %70 : vector<32x32xf32>
    %73 = arith.subf %72, %60 : vector<32x32xf32>
    %c0_47 = arith.constant 0 : index
    %c0_48 = arith.constant 0 : index
    %c0_49 = arith.constant 0 : index
    %74 = vector.load %arg8[%c0_47, %c0_48, %c0_49] : memref<1x32x32xf32, #tpu.memory_space<vmem>>, vector<1x32x32xf32>
    %75 = vector.shape_cast %74 : vector<1x32x32xf32> to vector<32x32xf32>
    %c0_50 = arith.constant 0 : index
    %c0_51 = arith.constant 0 : index
    %c0_52 = arith.constant 0 : index
    %76 = vector.load %arg5[%c0_50, %c0_51, %c0_52] : memref<3x32x32xf32, #tpu.memory_space<vmem>>, vector<1x32x32xf32>
    %77 = vector.shape_cast %76 : vector<1x32x32xf32> to vector<32x32xf32>
    %cst_53 = arith.constant dense<0.000000e+00> : vector<32x32xf32>
    %78 = tpu.matmul %60, %77, %cst_53 {dimension_numbers = #tpu.dot_dimension_numbers<[1], [0], [0], [1], [0, 0, 1, 1], [], []>} : vector<32x32xf32>, vector<32x32xf32>, vector<32x32xf32> -> vector<32x32xf32>
    %79 = arith.addf %75, %78 : vector<32x32xf32>
    %c1_54 = arith.constant 1 : index
    %c0_55 = arith.constant 0 : index
    %c0_56 = arith.constant 0 : index
    %80 = vector.load %arg5[%c1_54, %c0_55, %c0_56] : memref<3x32x32xf32, #tpu.memory_space<vmem>>, vector<1x32x32xf32>
    %81 = vector.shape_cast %80 : vector<1x32x32xf32> to vector<32x32xf32>
    %cst_57 = arith.constant dense<0.000000e+00> : vector<32x32xf32>
    %82 = tpu.matmul %65, %81, %cst_57 {dimension_numbers = #tpu.dot_dimension_numbers<[1], [0], [0], [1], [0, 0, 1, 1], [], []>} : vector<32x32xf32>, vector<32x32xf32>, vector<32x32xf32> -> vector<32x32xf32>
    %83 = arith.addf %79, %82 : vector<32x32xf32>
    %c2_58 = arith.constant 2 : index
    %c0_59 = arith.constant 0 : index
    %c0_60 = arith.constant 0 : index
    %84 = vector.load %arg5[%c2_58, %c0_59, %c0_60] : memref<3x32x32xf32, #tpu.memory_space<vmem>>, vector<1x32x32xf32>
    %85 = vector.shape_cast %84 : vector<1x32x32xf32> to vector<32x32xf32>
    %cst_61 = arith.constant dense<0.000000e+00> : vector<32x32xf32>
    %86 = tpu.matmul %73, %85, %cst_61 {dimension_numbers = #tpu.dot_dimension_numbers<[1], [0], [0], [1], [0, 0, 1, 1], [], []>} : vector<32x32xf32>, vector<32x32xf32>, vector<32x32xf32> -> vector<32x32xf32>
    %87 = arith.addf %83, %86 : vector<32x32xf32>
    %88 = math.tanh %87 : vector<32x32xf32>
    %89 = arith.mulf %59, %4 : vector<32x32xf32>
    %cst_62 = arith.constant 1.000000e+00 : f32
    %90 = vector.broadcast %cst_62 : f32 to vector<32x32xf32>
    %91 = arith.subf %90, %59 : vector<32x32xf32>
    %92 = arith.mulf %91, %88 : vector<32x32xf32>
    %93 = arith.addf %89, %92 : vector<32x32xf32>
    %c0_63 = arith.constant 0 : index
    %c0_64 = arith.constant 0 : index
    %94 = vector.load %arg10[%c0_63, %c0_64] : memref<32x32xf32, #tpu.memory_space<vmem>>, vector<32x32xf32>
    tpu.vector_store %arg10[%c0_63, %c0_64], %93 {strides = array<i32>} : memref<32x32xf32, #tpu.memory_space<vmem>>, vector<32x32xf32>,
    %c0_65 = arith.constant 0 : index
    %c0_66 = arith.constant 0 : index
    %c0_67 = arith.constant 0 : index
    %95 = vector.load %arg9[%c0_65, %c0_66, %c0_67] : memref<1x32x32xf32, #tpu.memory_space<vmem>>, vector<1x32x32xf32>
    %96 = vector.shape_cast %95 : vector<1x32x32xf32> to vector<32x32xf32>
    %97 = vector.shape_cast %93 : vector<32x32xf32> to vector<1x32x32xf32>
    tpu.vector_store %arg9[%c0_65, %c0_66, %c0_67], %97 {strides = array<i32>} : memref<1x32x32xf32, #tpu.memory_space<vmem>>, vector<1x32x32xf32>,
    return
  }
  func.func @transform_0(%arg0: i32) -> (i32, i32) {
    %c0_i32 = arith.constant 0 : i32
    %c0_i32_0 = arith.constant 0 : i32
    %c0_i32_1 = arith.constant 0 : i32
    return %c0_i32, %c0_i32_0 : i32, i32
  }
  func.func @transform_1(%arg0: i32) -> (i32, i32) {
    %c0_i32 = arith.constant 0 : i32
    %c0_i32_0 = arith.constant 0 : i32
    %c0_i32_1 = arith.constant 0 : i32
    return %c0_i32, %c0_i32_0 : i32, i32
  }
  func.func @transform_2(%arg0: i32) -> (i32, i32, i32) {
    %c0_i32 = arith.constant 0 : i32
    %c0_i32_0 = arith.constant 0 : i32
    %c0_i32_1 = arith.constant 0 : i32
    %c0_i32_2 = arith.constant 0 : i32
    return %c0_i32, %c0_i32_0, %c0_i32_1 : i32, i32, i32
  }
  func.func @transform_3(%arg0: i32) -> (i32, i32, i32) {
    %c0_i32 = arith.constant 0 : i32
    %c0_i32_0 = arith.constant 0 : i32
    %c0_i32_1 = arith.constant 0 : i32
    %c0_i32_2 = arith.constant 0 : i32
    return %c0_i32, %c0_i32_0, %c0_i32_1 : i32, i32, i32
  }
  func.func @transform_4(%arg0: i32) -> (i32, i32, i32) {
    %c0_i32 = arith.constant 0 : i32
    %c0_i32_0 = arith.constant 0 : i32
    %c0_i32_1 = arith.constant 0 : i32
    %c0_i32_2 = arith.constant 0 : i32
    return %c0_i32, %c0_i32_0, %c0_i32_1 : i32, i32, i32
  }
  func.func @transform_5(%arg0: i32) -> (i32, i32, i32) {
    %c0_i32 = arith.constant 0 : i32
    %c0_i32_0 = arith.constant 0 : i32
    %c0_i32_1 = arith.constant 0 : i32
    return %arg0, %c0_i32, %c0_i32_0 : i32, i32, i32
  }
  func.func @transform_6(%arg0: i32) -> (i32, i32, i32) {
    %c0_i32 = arith.constant 0 : i32
    %c0_i32_0 = arith.constant 0 : i32
    %c0_i32_1 = arith.constant 0 : i32
    return %arg0, %c0_i32, %c0_i32_0 : i32, i32, i32
  }
  func.func @transform_7(%arg0: i32) -> (i32, i32, i32) {
    %c0_i32 = arith.constant 0 : i32
    %c0_i32_0 = arith.constant 0 : i32
    %c0_i32_1 = arith.constant 0 : i32
    return %arg0, %c0_i32, %c0_i32_0 : i32, i32, i32
  }
  func.func @transform_8(%arg0: i32) -> (i32, i32, i32) {
    %c0_i32 = arith.constant 0 : i32
    %c0_i32_0 = arith.constant 0 : i32
    %c0_i32_1 = arith.constant 0 : i32
    return %arg0, %c0_i32, %c0_i32_0 : i32, i32, i32
  }
}

</mosaic_0001>

<llo_original>
// kernel: fagru_sequence.1
$region0: #{fagru_sequence.1}
  #allocation0 [shape = 'u32[]', space=smem, size = 0x4, offset = 0x4, fixed_abs, tag = 'smem constant byte address 0x4 - core index']
  #allocation1 [shape = 'u32[144,128]{1,0:T(1,128)}', space=vmem, size = 0x12000, scoped, tag = 'internal scratch']
  #allocation2 [shape = 'f32[32,32]{1,0:T(8,128)}', space=vmem, size = 0x4000, scoped, tag = 'scratch operand']
  %s0 = inlined_call_operand.vmem [shape: f32[32,32], index: 0, kind: input, shape index: {}]
  %s1 = inlined_call_operand.vmem [shape: f32[16,16], index: 1, kind: input, shape index: {}]
  %s2 = inlined_call_operand.vmem [shape: f32[3,32,32], index: 2, kind: input, shape index: {}]
  %s3 = inlined_call_operand.vmem [shape: f32[3,32,32], index: 3, kind: input, shape index: {}]
  %s4 = inlined_call_operand.vmem [shape: f32[3,32,32], index: 4, kind: input, shape index: {}]
  %s5 = inlined_call_operand.vmem [shape: f32[8,32,32], index: 5, kind: input, shape index: {}]
  %s6 = inlined_call_operand.vmem [shape: f32[8,32,32], index: 6, kind: input, shape index: {}]
  %s7 = inlined_call_operand.vmem [shape: f32[8,32,32], index: 7, kind: input, shape index: {}]
  %s8 = inlined_call_operand.vmem [shape: f32[8,32,32], index: 8, kind: output, shape index: {}]
  %s9 = sld [smem:[#allocation0]]
  $region69: #{fagru_sequence.1} parent=0
    _
  %s11 = ssub.s32 1, %s9
  %s12 = scalar_select 0, %s11, %s9
  loop: start=0, step=1, limit=10
  $region2: #{fagru_sequence.1} parent=0 // loop_pre_header
    _
  $region3: #{fagru_sequence.1} parent=0 // loop_header
    %s14 = sphi 0, %s18
    %p15 = scmp.ge.s32.totalorder %s14, 10
    %s22 = sphi 0, %s22
    %s24 = sphi 0, %s22
    %s25 = sphi 0, %s24
    %s39 = sphi 0, %s25
    %s43 = sphi 0, %s43
    %s45 = sphi 0, %s43
    %s46 = sphi 0, %s45
    %s60 = sphi 0, %s46
    %s64 = sphi 0, %s64
    %s66 = sphi 0, %s64
    %s67 = sphi 0, %s66
    %s81 = sphi 0, %s67
    %s85 = sphi 0, %s85
    %s87 = sphi 0, %s85
    %s88 = sphi 0, %s87
    %s102 = sphi 0, %s88
    %s106 = sphi 0, %s106
    %s108 = sphi 0, %s106
    %s109 = sphi 0, %s108
    %s123 = sphi 0, %s109
    %s129 = sphi 0, %s131
    %s132 = sphi 0, %s129
    %s133 = sphi 0, %s132
    %s149 = sphi 0, %s133
    %s155 = sphi 0, %s157
    %s158 = sphi 0, %s155
    %s159 = sphi 0, %s158
    %s175 = sphi 0, %s159
    %s181 = sphi 0, %s183
    %s184 = sphi 0, %s181
    %s185 = sphi 0, %s184
    %s201 = sphi 0, %s185
    %s207 = sphi 0, %s209
    %s210 = sphi 0, %s207
    %s211 = sphi 0, %s210
    %s227 = sphi 0, %s211
  $region4: #{fagru_sequence.1} parent=0 // loop_header_branch
    %17 = sbr.rel (%p15) target = $region8
  $region5: #{fagru_sequence.1} parent=0 // loop_body
    %s19 = ssub.s32 %s14, 1
    %s20 = ssub.s32 %s14, 2
    %s21 = sadd.s32 %s14, 1
    %s23 = sadd.s32 %s22, 1
    %p26 = scmp.eq.s32.totalorder %s14, 7
    %p27 = scmp.ne.s32.totalorder %s22, %s24
    %p28 = scmp.eq.s32.totalorder %s14, 0
    %p29 = por %p27, %p28
    %p30 = scmp.ne.s32.totalorder %s22, %s24
    %p31 = scmp.eq.s32.totalorder %s19, 7
    %p32 = por %p30, %p31
    %p33 = scmp.ne.s32.totalorder %s24, %s25
    %p34 = scmp.eq.s32.totalorder %s19, 0
    %p35 = por %p33, %p34
    %p36 = scmp.ne.s32.totalorder %s24, %s25
    %p37 = scmp.eq.s32.totalorder %s20, 7
    %p38 = por %p36, %p37
    %p40 = scmp.ne.s32.totalorder %s25, %s39
    %p41 = scmp.eq.s32.totalorder %s20, 0
    %p42 = por %p40, %p41
    %s44 = sadd.s32 %s43, 1
    %p47 = scmp.eq.s32.totalorder %s14, 7
    %p48 = scmp.ne.s32.totalorder %s43, %s45
    %p49 = scmp.eq.s32.totalorder %s14, 0
    %p50 = por %p48, %p49
    %p51 = scmp.ne.s32.totalorder %s43, %s45
    %p52 = scmp.eq.s32.totalorder %s19, 7
    %p53 = por %p51, %p52
    %p54 = scmp.ne.s32.totalorder %s45, %s46
    %p55 = scmp.eq.s32.totalorder %s19, 0
    %p56 = por %p54, %p55
    %p57 = scmp.ne.s32.totalorder %s45, %s46
    %p58 = scmp.eq.s32.totalorder %s20, 7
    %p59 = por %p57, %p58
    %p61 = scmp.ne.s32.totalorder %s46, %s60
    %p62 = scmp.eq.s32.totalorder %s20, 0
    %p63 = por %p61, %p62
    %s65 = sadd.s32 %s64, 1
    %p68 = scmp.eq.s32.totalorder %s14, 7
    %p69 = scmp.ne.s32.totalorder %s64, %s66
    %p70 = scmp.eq.s32.totalorder %s14, 0
    %p71 = por %p69, %p70
    %p72 = scmp.ne.s32.totalorder %s64, %s66
    %p73 = scmp.eq.s32.totalorder %s19, 7
    %p74 = por %p72, %p73
    %p75 = scmp.ne.s32.totalorder %s66, %s67
    %p76 = scmp.eq.s32.totalorder %s19, 0
    %p77 = por %p75, %p76
    %p78 = scmp.ne.s32.totalorder %s66, %s67
    %p79 = scmp.eq.s32.totalorder %s20, 7
    %p80 = por %p78, %p79
    %p82 = scmp.ne.s32.totalorder %s67, %s81
    %p83 = scmp.eq.s32.totalorder %s20, 0
    %p84 = por %p82, %p83
    %s86 = sadd.s32 %s85, 1
    %p89 = scmp.eq.s32.totalorder %s14, 7
    %p90 = scmp.ne.s32.totalorder %s85, %s87
    %p91 = scmp.eq.s32.totalorder %s14, 0
    %p92 = por %p90, %p91
    %p93 = scmp.ne.s32.totalorder %s85, %s87
    %p94 = scmp.eq.s32.totalorder %s19, 7
    %p95 = por %p93, %p94
    %p96 = scmp.ne.s32.totalorder %s87, %s88
    %p97 = scmp.eq.s32.totalorder %s19, 0
    %p98 = por %p96, %p97
    %p99 = scmp.ne.s32.totalorder %s87, %s88
    %p100 = scmp.eq.s32.totalorder %s20, 7
    %p101 = por %p99, %p100
    %p103 = scmp.ne.s32.totalorder %s88, %s102
    %p104 = scmp.eq.s32.totalorder %s20, 0
    %p105 = por %p103, %p104
    %s107 = sadd.s32 %s106, 1
    %p110 = scmp.eq.s32.totalorder %s14, 7
    %p111 = scmp.ne.s32.totalorder %s106, %s108
    %p112 = scmp.eq.s32.totalorder %s14, 0
    %p113 = por %p111, %p112
    %p114 = scmp.ne.s32.totalorder %s106, %s108
    %p115 = scmp.eq.s32.totalorder %s19, 7
    %p116 = por %p114, %p115
    %p117 = scmp.ne.s32.totalorder %s108, %s109
    %p118 = scmp.eq.s32.totalorder %s19, 0
    %p119 = por %p117, %p118
    %p120 = scmp.ne.s32.totalorder %s108, %s109
    %p121 = scmp.eq.s32.totalorder %s20, 7
    %p122 = por %p120, %p121
    %p124 = scmp.ne.s32.totalorder %s109, %s123
    %p125 = scmp.eq.s32.totalorder %s20, 0
    %p126 = por %p124, %p125
    %s127 = ssub.s32 %s14, %s21
    %p128 = scmp.eq.s32.totalorder %s127, 0
    %s130 = sadd.s32 %s129, 1
    %s131 = scalar_select %p128, %s129, %s130
    %p134 = pneg %p128
    %p135 = scmp.eq.s32.totalorder %s14, 7
    %p136 = por %p134, %p135
    %p137 = scmp.ne.s32.totalorder %s129, %s132
    %p138 = scmp.eq.s32.totalorder %s14, 0
    %p139 = por %p137, %p138
    %p140 = scmp.ne.s32.totalorder %s129, %s132
    %p141 = scmp.eq.s32.totalorder %s19, 7
    %p142 = por %p140, %p141
    %p143 = scmp.ne.s32.totalorder %s132, %s133
    %p144 = scmp.eq.s32.totalorder %s19, 0
    %p145 = por %p143, %p144
    %p146 = scmp.ne.s32.totalorder %s132, %s133
    %p147 = scmp.eq.s32.totalorder %s20, 7
    %p148 = por %p146, %p147
    %p150 = scmp.ne.s32.totalorder %s133, %s149
    %p151 = scmp.eq.s32.totalorder %s20, 0
    %p152 = por %p150, %p151
    %s153 = ssub.s32 %s14, %s21
    %p154 = scmp.eq.s32.totalorder %s153, 0
    %s156 = sadd.s32 %s155, 1
    %s157 = scalar_select %p154, %s155, %s156
    %p160 = pneg %p154
    %p161 = scmp.eq.s32.totalorder %s14, 7
    %p162 = por %p160, %p161
    %p163 = scmp.ne.s32.totalorder %s155, %s158
    %p164 = scmp.eq.s32.totalorder %s14, 0
    %p165 = por %p163, %p164
    %p166 = scmp.ne.s32.totalorder %s155, %s158
    %p167 = scmp.eq.s32.totalorder %s19, 7
    %p168 = por %p166, %p167
    %p169 = scmp.ne.s32.totalorder %s158, %s159
    %p170 = scmp.eq.s32.totalorder %s19, 0
    %p171 = por %p169, %p170
    %p172 = scmp.ne.s32.totalorder %s158, %s159
    %p173 = scmp.eq.s32.totalorder %s20, 7
    %p174 = por %p172, %p173
    %p176 = scmp.ne.s32.totalorder %s159, %s175
    %p177 = scmp.eq.s32.totalorder %s20, 0
    %p178 = por %p176, %p177
    %s179 = ssub.s32 %s14, %s21
    %p180 = scmp.eq.s32.totalorder %s179, 0
    %s182 = sadd.s32 %s181, 1
    %s183 = scalar_select %p180, %s181, %s182
    %p186 = pneg %p180
    %p187 = scmp.eq.s32.totalorder %s14, 7
    %p188 = por %p186, %p187
    %p189 = scmp.ne.s32.totalorder %s181, %s184
    %p190 = scmp.eq.s32.totalorder %s14, 0
    %p191 = por %p189, %p190
    %p192 = scmp.ne.s32.totalorder %s181, %s184
    %p193 = scmp.eq.s32.totalorder %s19, 7
    %p194 = por %p192, %p193
    %p195 = scmp.ne.s32.totalorder %s184, %s185
    %p196 = scmp.eq.s32.totalorder %s19, 0
    %p197 = por %p195, %p196
    %p198 = scmp.ne.s32.totalorder %s184, %s185
    %p199 = scmp.eq.s32.totalorder %s20, 7
    %p200 = por %p198, %p199
    %p202 = scmp.ne.s32.totalorder %s185, %s201
    %p203 = scmp.eq.s32.totalorder %s20, 0
    %p204 = por %p202, %p203
    %s205 = ssub.s32 %s14, %s21
    %p206 = scmp.eq.s32.totalorder %s205, 0
    %s208 = sadd.s32 %s207, 1
    %s209 = scalar_select %p206, %s207, %s208
    %p212 = pneg %p206
    %p213 = scmp.eq.s32.totalorder %s14, 7
    %p214 = por %p212, %p213
    %p215 = scmp.ne.s32.totalorder %s207, %s210
    %p216 = scmp.eq.s32.totalorder %s14, 0
    %p217 = por %p215, %p216
    %p218 = scmp.ne.s32.totalorder %s207, %s210
    %p219 = scmp.eq.s32.totalorder %s19, 7
    %p220 = por %p218, %p219
    %p221 = scmp.ne.s32.totalorder %s210, %s211
    %p222 = scmp.eq.s32.totalorder %s19, 0
    %p223 = por %p221, %p222
    %p224 = scmp.ne.s32.totalorder %s210, %s211
    %p225 = scmp.eq.s32.totalorder %s20, 7
    %p226 = por %p224, %p225
    %p228 = scmp.ne.s32.totalorder %s211, %s227
    %p229 = scmp.eq.s32.totalorder %s20, 0
    %p230 = por %p228, %p229
    %p231 = scmp.le.s32.totalorder 1, %s14
    %p232 = scmp.lt.s32.totalorder %s14, 9
    %p233 = pnand %p231, %p232
    %p234 = pneg %p233
    // Predicated region
    $region9: #{fagru_sequence.1} parent=5 // pred_check
      _
    $region10: #{fagru_sequence.1} parent=5 // pred_check_branch
      %236 = sbr.rel (%p233) target = $region12
    $region11: #{fagru_sequence.1} parent=5 // pred_region
      %s237 = ssub.s32 %s14, 1
      // Predicated region
      $region13: #{fagru_sequence.1} parent=11 // pred_check
        %p238 = pneg %p35
      $region14: #{fagru_sequence.1} parent=11 // pred_check_branch
        %240 = sbr.rel (%p238) target = $region16
      $region15: #{fagru_sequence.1} parent=11 // pred_region
        _
      $region16: #{fagru_sequence.1} parent=11 // pred_fallthru
        _
      // Predicated region
      $region17: #{fagru_sequence.1} parent=11 // pred_check
        %p241 = pneg %p56
      $region18: #{fagru_sequence.1} parent=11 // pred_check_branch
        %243 = sbr.rel (%p241) target = $region20
      $region19: #{fagru_sequence.1} parent=11 // pred_region
        _
      $region20: #{fagru_sequence.1} parent=11 // pred_fallthru
        _
      // Predicated region
      $region21: #{fagru_sequence.1} parent=11 // pred_check
        %p244 = pneg %p77
      $region22: #{fagru_sequence.1} parent=11 // pred_check_branch
        %246 = sbr.rel (%p244) target = $region24
      $region23: #{fagru_sequence.1} parent=11 // pred_region
        _
      $region24: #{fagru_sequence.1} parent=11 // pred_fallthru
        _
      // Predicated region
      $region25: #{fagru_sequence.1} parent=11 // pred_check
        %p247 = pneg %p98
      $region26: #{fagru_sequence.1} parent=11 // pred_check_branch
        %249 = sbr.rel (%p247) target = $region28
      $region27: #{fagru_sequence.1} parent=11 // pred_region
        _
      $region28: #{fagru_sequence.1} parent=11 // pred_fallthru
        _
      // Predicated region
      $region29: #{fagru_sequence.1} parent=11 // pred_check
        %p250 = pneg %p119
      $region30: #{fagru_sequence.1} parent=11 // pred_check_branch
        %252 = sbr.rel (%p250) target = $region32
      $region31: #{fagru_sequence.1} parent=11 // pred_region
        _
      $region32: #{fagru_sequence.1} parent=11 // pred_fallthru
        _
    $region12: #{fagru_sequence.1} parent=5 // pred_fallthru
      _
    %p253 = scmp.lt.s32.totalorder %s14, 8
    // Predicated region
    $region33: #{fagru_sequence.1} parent=5 // pred_check
      %p254 = pneg %p253
    $region34: #{fagru_sequence.1} parent=5 // pred_check_branch
      %256 = sbr.rel (%p254) target = $region36
    $region35: #{fagru_sequence.1} parent=5 // pred_region
      // Predicated region
      $region37: #{fagru_sequence.1} parent=35 // pred_check
        %p257 = pneg %p139
      $region38: #{fagru_sequence.1} parent=35 // pred_check_branch
        %259 = sbr.rel (%p257) target = $region40
      $region39: #{fagru_sequence.1} parent=35 // pred_region
        %p260 = scmp.lt.s32.totalorder %s14, 7
        %s261 = scalar_select %p260, %s14, 7
        %s262 = smul.addr %s261, 4
        %s263 = smul.addr %s262, 8
        %s264 = scalar_lea.vmem %s5, %s263
      $region40: #{fagru_sequence.1} parent=35 // pred_fallthru
        _
      // Predicated region
      $region41: #{fagru_sequence.1} parent=35 // pred_check
        %p265 = pneg %p165
      $region42: #{fagru_sequence.1} parent=35 // pred_check_branch
        %267 = sbr.rel (%p265) target = $region44
      $region43: #{fagru_sequence.1} parent=35 // pred_region
        %p268 = scmp.lt.s32.totalorder %s14, 7
        %s269 = scalar_select %p268, %s14, 7
        %s270 = smul.addr %s269, 4
        %s271 = smul.addr %s270, 8
        %s272 = scalar_lea.vmem %s6, %s271
      $region44: #{fagru_sequence.1} parent=35 // pred_fallthru
        _
      // Predicated region
      $region45: #{fagru_sequence.1} parent=35 // pred_check
        %p273 = pneg %p191
      $region46: #{fagru_sequence.1} parent=35 // pred_check_branch
        %275 = sbr.rel (%p273) target = $region48
      $region47: #{fagru_sequence.1} parent=35 // pred_region
        %p276 = scmp.lt.s32.totalorder %s14, 7
        %s277 = scalar_select %p276, %s14, 7
        %s278 = smul.addr %s277, 4
        %s279 = smul.addr %s278, 8
        %s280 = scalar_lea.vmem %s7, %s279
      $region48: #{fagru_sequence.1} parent=35 // pred_fallthru
        _
    $region36: #{fagru_sequence.1} parent=5 // pred_fallthru
      _
    %p281 = scmp.le.s32.totalorder 1, %s14
    %p282 = scmp.lt.s32.totalorder %s14, 9
    %p283 = pnand %p281, %p282
    %p284 = pneg %p283
    // Predicated region
    $region49: #{fagru_sequence.1} parent=5 // pred_check
      _
    $region50: #{fagru_sequence.1} parent=5 // pred_check_branch
      %286 = sbr.rel (%p283) target = $region52
    $region51: #{fagru_sequence.1} parent=5 // pred_region
      %s287 = ssub.s32 %s14, 1
      %p288 = pneg %p35
      %p289 = pneg %p32
      %p290 = pneg %p56
      %p291 = pneg %p53
      %p292 = pneg %p77
      %p293 = pneg %p74
      %p294 = pneg %p98
      %p295 = pneg %p95
      %p296 = pneg %p119
      %p297 = pneg %p116
      %p298 = scmp.lt.s32.totalorder %s19, 7
      %s299 = scalar_select %p298, %s19, 7
      %s300 = smul.addr %s299, 4
      %s301 = smul.addr %s300, 8
      %s302 = scalar_lea.vmem %s5, %s301
      %p303 = pneg %p145
      %p304 = pneg %p142
      %p305 = scmp.lt.s32.totalorder %s19, 7
      %s306 = scalar_select %p305, %s19, 7
      %s307 = smul.addr %s306, 4
      %s308 = smul.addr %s307, 8
      %s309 = scalar_lea.vmem %s6, %s308
      %p310 = pneg %p171
      %p311 = pneg %p168
      %p312 = scmp.lt.s32.totalorder %s19, 7
      %s313 = scalar_select %p312, %s19, 7
      %s314 = smul.addr %s313, 4
      %s315 = smul.addr %s314, 8
      %s316 = scalar_lea.vmem %s7, %s315
      %p317 = pneg %p197
      %p318 = pneg %p194
      %p319 = pneg %p223
      %p320 = pneg %p220
      %p321 = scmp.lt.s32.totalorder %s19, 7
      %s322 = scalar_select %p321, %s19, 7
      %s323 = smul.addr %s322, 4
      %s324 = smul.addr %s323, 8
      %s325 = scalar_lea.vmem %s8, %s324
      %p326 = scmp.lt.s32.totalorder %s19, 7
      %s327 = scalar_select %p326, %s19, 7
      %s328 = smul.addr %s327, 4
      %s329 = smul.addr %s328, 8
      %s330 = scalar_lea.vmem %s5, %s329
      %p331 = scmp.lt.s32.totalorder %s19, 7
      %s332 = scalar_select %p331, %s19, 7
      %s333 = smul.addr %s332, 4
      %s334 = smul.addr %s333, 8
      %s335 = scalar_lea.vmem %s6, %s334
      %p336 = scmp.lt.s32.totalorder %s19, 7
      %s337 = scalar_select %p336, %s19, 7
      %s338 = smul.addr %s337, 4
      %s339 = smul.addr %s338, 8
      %s340 = scalar_lea.vmem %s7, %s339
      %p341 = scmp.lt.s32.totalorder %s19, 7
      %s342 = scalar_select %p341, %s19, 7
      %s343 = smul.addr %s342, 4
      %s344 = smul.addr %s343, 8
      %s345 = scalar_lea.vmem %s8, %s344
      %p346 = scmp.eq.s32.totalorder %s19, 0
      // Predicated region
      $region53: #{fagru_sequence.1} parent=51 // pred_check
        %p347 = pneg %p346
      $region54: #{fagru_sequence.1} parent=51 // pred_check_branch
        %349 = sbr.rel (%p347) target = $region56
      $region55: #{fagru_sequence.1} parent=51 // pred_region
        %v350 = vld [vmem:[%s0] sm:$0xff]
        %v351 = vld [vmem:[%s0 + $0x8] sm:$0xff]
        %v352 = vld [vmem:[%s0 + $0x10] sm:$0xff]
        %v353 = vld [vmem:[%s0 + $0x18] sm:$0xff]
        %vm354 = vcmask 261120
        %355 = vst.msk [vmem:[#allocation2] sm:$0xff] %vm354, %v350
        %356 = vst.msk [vmem:[#allocation2 + $0x8] sm:$0xff] %vm354, %v351
        %357 = vst.msk [vmem:[#allocation2 + $0x10] sm:$0xff] %vm354, %v352
        %358 = vst.msk [vmem:[#allocation2 + $0x18] sm:$0xff] %vm354, %v353
      $region56: #{fagru_sequence.1} parent=51 // pred_fallthru
        _
      %v359 = vld [vmem:[%s1] sm:$0xff]
      %v360 = vld [vmem:[%s1 + $0x8] sm:$0xff]
      %v361 = vld [vmem:[#allocation2] sm:$0xff]
      %v362 = vld [vmem:[#allocation2 + $0x8] sm:$0xff]
      %v363 = vld [vmem:[#allocation2 + $0x10] sm:$0xff]
      %v364 = vld [vmem:[#allocation2 + $0x18] sm:$0xff]
      %vm365 = vcmask 130048
      %v367 = vsel %vm365, %v359, 0
      %v370 = vsel %vm365, %v360, 0
      %372 = vmatprep.subr.mxu0 0.0
      %373 = vmatpush1.msra.mxu0 0.0
      %374 = vmatprep.subr.mxu0 0.0
      %375 = vmatpush1.msra.mxu0 0.0
      %376 = vmatprep.subr.mxu0 0.0
      %377 = vmatpush1.msra.mxu0 0.0
      %378 = vmatprep.subr.mxu0 0.0
      %379 = vmatpush1.msra.mxu0 0.0
      %380 = vmatprep.subr.mxu0 0.0
      %381 = vmatpush1.msra.mxu0 0.0
      %382 = vmatprep.subr.mxu0 0.0
      %383 = vmatpush1.msra.mxu0 0.0
      %384 = vmatprep.subr.mxu0 0.0
      %385 = vmatpush1.msra.mxu0 0.0
      %386 = vmatprep.subr.mxu0 0.0
      %387 = vmatpush1.msra.mxu0 0.0
      %388 = vmatprep.subr.mxu0 0.0
      %389 = vmatpush1.msra.mxu0 0.0
      %390 = vmatprep.subr.mxu0 0.0
      %391 = vmatpush1.msra.mxu0 0.0
      %392 = vmatprep.subr.mxu0 0.0
      %393 = vmatpush1.msra.mxu0 0.0
      %394 = vmatprep.subr.mxu0 0.0
      %395 = vmatpush1.msra.mxu0 0.0
      %396 = vmatprep.subr.mxu0 0.0
      %397 = vmatpush1.msra.mxu0 0.0
      %398 = vmatprep.subr.mxu0 0.0
      %399 = vmatpush1.msra.mxu0 0.0
      %400 = vmatprep.subr.mxu0 0.0
      %401 = vmatpush1.msra.mxu0 %v362
      %402 = vmatprep.subr.mxu0 0.0
      %403 = vmatpush1.msra.mxu0 %v361
      %404 = vmatprep.subr.mxu0 0.0
      %405 = vmatpush2.msra.mxu0 0.0
      %406 = vmatprep.subr.mxu0 0.0
      %407 = vmatpush2.msra.mxu0 0.0
      %408 = vmatprep.subr.mxu0 0.0
      %409 = vmatpush2.msra.mxu0 0.0
      %410 = vmatprep.subr.mxu0 0.0
      %411 = vmatpush2.msra.mxu0 0.0
      %412 = vmatprep.subr.mxu0 0.0
      %413 = vmatpush2.msra.mxu0 0.0
      %414 = vmatprep.subr.mxu0 0.0
      %415 = vmatpush2.msra.mxu0 0.0
      %416 = vmatprep.subr.mxu0 0.0
      %417 = vmatpush2.msra.mxu0 0.0
      %418 = vmatprep.subr.mxu0 0.0
      %419 = vmatpush2.msra.mxu0 0.0
      %420 = vmatprep.subr.mxu0 0.0
      %421 = vmatpush2.msra.mxu0 0.0
      %422 = vmatprep.subr.mxu0 0.0
      %423 = vmatpush2.msra.mxu0 0.0
      %424 = vmatprep.subr.mxu0 0.0
      %425 = vmatpush2.msra.mxu0 0.0
      %426 = vmatprep.subr.mxu0 0.0
      %427 = vmatpush2.msra.mxu0 0.0
      %428 = vmatprep.subr.mxu0 0.0
      %429 = vmatpush2.msra.mxu0 0.0
      %430 = vmatprep.subr.mxu0 0.0
      %431 = vmatpush2.msra.mxu0 0.0
      %432 = vmatprep.subr.mxu0 0.0
      %433 = vmatpush2.msra.mxu0 0.0
      %434 = vmatprep.subr.mxu0 0.0
      %435 = vmatpush2.msra.mxu0 0.0
      %436 = vmatprep.mubr.f32.mxu0 0.0
      %437 = vmatmul.mubr.f32.gmra.mxu0 %v367
      %v438 = vpop.f32.mrf.mxu0
      %v439 = vadd.f32 0.0, %v438
      %v440 = vpop.f32.mrf.mxu0
      %441 = vmatprep.mubr.f32.mxu0 0.0
      %442 = vmatmul.mubr.f32.gmra.mxu0 %v370
      %v443 = vpop.f32.mrf.mxu0
      %v444 = vadd.f32 0.0, %v443
      %v445 = vpop.f32.mrf.mxu0
      %446 = vdwg.mxu0
      %447 = vmatprep.subr.mxu0 0.0
      %448 = vmatpush1.msra.mxu0 0.0
      %449 = vmatprep.subr.mxu0 0.0
      %450 = vmatpush1.msra.mxu0 0.0
      %451 = vmatprep.subr.mxu0 0.0
      %452 = vmatpush1.msra.mxu0 0.0
      %453 = vmatprep.subr.mxu0 0.0
      %454 = vmatpush1.msra.mxu0 0.0
      %455 = vmatprep.subr.mxu0 0.0
      %456 = vmatpush1.msra.mxu0 0.0
      %457 = vmatprep.subr.mxu0 0.0
      %458 = vmatpush1.msra.mxu0 0.0
      %459 = vmatprep.subr.mxu0 0.0
      %460 = vmatpush1.msra.mxu0 0.0
      %461 = vmatprep.subr.mxu0 0.0
      %462 = vmatpush1.msra.mxu0 0.0
      %463 = vmatprep.subr.mxu0 0.0
      %464 = vmatpush1.msra.mxu0 0.0
      %465 = vmatprep.subr.mxu0 0.0
      %466 = vmatpush1.msra.mxu0 0.0
      %467 = vmatprep.subr.mxu0 0.0
      %468 = vmatpush1.msra.mxu0 0.0
      %469 = vmatprep.subr.mxu0 0.0
      %470 = vmatpush1.msra.mxu0 0.0
      %471 = vmatprep.subr.mxu0 0.0
      %472 = vmatpush1.msra.mxu0 0.0
      %473 = vmatprep.subr.mxu0 0.0
      %474 = vmatpush1.msra.mxu0 0.0
      %475 = vmatprep.subr.mxu0 0.0
      %476 = vmatpush1.msra.mxu0 %v364
      %477 = vmatprep.subr.mxu0 0.0
      %478 = vmatpush1.msra.mxu0 %v363
      %479 = vmatprep.subr.mxu0 0.0
      %480 = vmatpush2.msra.mxu0 0.0
      %481 = vmatprep.subr.mxu0 0.0
      %482 = vmatpush2.msra.mxu0 0.0
      %483 = vmatprep.subr.mxu0 0.0
      %484 = vmatpush2.msra.mxu0 0.0
      %485 = vmatprep.subr.mxu0 0.0
      %486 = vmatpush2.msra.mxu0 0.0
      %487 = vmatprep.subr.mxu0 0.0
      %488 = vmatpush2.msra.mxu0 0.0
      %489 = vmatprep.subr.mxu0 0.0
      %490 = vmatpush2.msra.mxu0 0.0
      %491 = vmatprep.subr.mxu0 0.0
      %492 = vmatpush2.msra.mxu0 0.0
      %493 = vmatprep.subr.mxu0 0.0
      %494 = vmatpush2.msra.mxu0 0.0
      %495 = vmatprep.subr.mxu0 0.0
      %496 = vmatpush2.msra.mxu0 0.0
      %497 = vmatprep.subr.mxu0 0.0
      %498 = vmatpush2.msra.mxu0 0.0
      %499 = vmatprep.subr.mxu0 0.0
      %500 = vmatpush2.msra.mxu0 0.0
      %501 = vmatprep.subr.mxu0 0.0
      %502 = vmatpush2.msra.mxu0 0.0
      %503 = vmatprep.subr.mxu0 0.0
      %504 = vmatpush2.msra.mxu0 0.0
      %505 = vmatprep.subr.mxu0 0.0
      %506 = vmatpush2.msra.mxu0 0.0
      %507 = vmatprep.subr.mxu0 0.0
      %508 = vmatpush2.msra.mxu0 0.0
      %509 = vmatprep.subr.mxu0 0.0
      %510 = vmatpush2.msra.mxu0 0.0
      %511 = vmatprep.mubr.f32.mxu0 0.0
      %512 = vmatmul.mubr.f32.gmra.mxu0 %v367
      %v513 = vpop.f32.mrf.mxu0
      %v514 = vadd.f32 0.0, %v513
      %v515 = vpop.f32.mrf.mxu0
      %516 = vmatprep.mubr.f32.mxu0 0.0
      %517 = vmatmul.mubr.f32.gmra.mxu0 %v370
      %v518 = vpop.f32.mrf.mxu0
      %v519 = vadd.f32 0.0, %v518
      %v520 = vpop.f32.mrf.mxu0
      %521 = vdwg.mxu0
      %522 = vmatprep.subr.mxu0 0.0
      %523 = vmatpush1.msra.mxu0 0.0
      %524 = vmatprep.subr.mxu0 0.0
      %525 = vmatpush1.msra.mxu0 0.0
      %526 = vmatprep.subr.mxu0 0.0
      %527 = vmatpush1.msra.mxu0 0.0
      %528 = vmatprep.subr.mxu0 0.0
      %529 = vmatpush1.msra.mxu0 0.0
      %530 = vmatprep.subr.mxu0 0.0
      %531 = vmatpush1.msra.mxu0 0.0
      %532 = vmatprep.subr.mxu0 0.0
      %533 = vmatpush1.msra.mxu0 0.0
      %534 = vmatprep.subr.mxu0 0.0
      %535 = vmatpush1.msra.mxu0 0.0
      %536 = vmatprep.subr.mxu0 0.0
      %537 = vmatpush1.msra.mxu0 0.0
      %538 = vmatprep.subr.mxu0 0.0
      %539 = vmatpush1.msra.mxu0 0.0
      %540 = vmatprep.subr.mxu0 0.0
      %541 = vmatpush1.msra.mxu0 0.0
      %542 = vmatprep.subr.mxu0 0.0
      %543 = vmatpush1.msra.mxu0 0.0
      %544 = vmatprep.subr.mxu0 0.0
      %545 = vmatpush1.msra.mxu0 0.0
      %546 = vmatprep.subr.mxu0 0.0
      %547 = vmatpush1.msra.mxu0 0.0
      %548 = vmatprep.subr.mxu0 0.0
      %549 = vmatpush1.msra.mxu0 0.0
      %550 = vmatprep.subr.mxu0 0.0
      %551 = vmatpush1.msra.mxu0 %v444
      %552 = vmatprep.subr.mxu0 0.0
      %553 = vmatpush1.msra.mxu0 %v439
      %554 = vmatprep.subr.mxu0 0.0
      %555 = vmatpush2.msra.mxu0 0.0
      %556 = vmatprep.subr.mxu0 0.0
      %557 = vmatpush2.msra.mxu0 0.0
      %558 = vmatprep.subr.mxu0 0.0
      %559 = vmatpush2.msra.mxu0 0.0
      %560 = vmatprep.subr.mxu0 0.0
      %561 = vmatpush2.msra.mxu0 0.0
      %562 = vmatprep.subr.mxu0 0.0
      %563 = vmatpush2.msra.mxu0 0.0
      %564 = vmatprep.subr.mxu0 0.0
      %565 = vmatpush2.msra.mxu0 0.0
      %566 = vmatprep.subr.mxu0 0.0
      %567 = vmatpush2.msra.mxu0 0.0
      %568 = vmatprep.subr.mxu0 0.0
      %569 = vmatpush2.msra.mxu0 0.0
      %570 = vmatprep.subr.mxu0 0.0
      %571 = vmatpush2.msra.mxu0 0.0
      %572 = vmatprep.subr.mxu0 0.0
      %573 = vmatpush2.msra.mxu0 0.0
      %574 = vmatprep.subr.mxu0 0.0
      %575 = vmatpush2.msra.mxu0 0.0
      %576 = vmatprep.subr.mxu0 0.0
      %577 = vmatpush2.msra.mxu0 0.0
      %578 = vmatprep.subr.mxu0 0.0
      %579 = vmatpush2.msra.mxu0 0.0
      %580 = vmatprep.subr.mxu0 0.0
      %581 = vmatpush2.msra.mxu0 0.0
      %582 = vmatprep.subr.mxu0 0.0
      %583 = vmatpush2.msra.mxu0 0.0
      %584 = vmatprep.subr.mxu0 0.0
      %585 = vmatpush2.msra.mxu0 0.0
      %586 = vmatprep.mubr.f32.mxu0 0.0
      %587 = vmatmul.mubr.f32.gmra.mxu0 %v367
      %v588 = vpop.f32.mrf.mxu0
      %v589 = vadd.f32 0.0, %v588
      %v590 = vpop.f32.mrf.mxu0
      %591 = vmatprep.mubr.f32.mxu0 0.0
      %592 = vmatmul.mubr.f32.gmra.mxu0 %v370
      %v593 = vpop.f32.mrf.mxu0
      %v594 = vadd.f32 0.0, %v593
      %v595 = vpop.f32.mrf.mxu0
      %596 = vdwg.mxu0
      %597 = vmatprep.subr.mxu0 0.0
      %598 = vmatpush1.msra.mxu0 0.0
      %599 = vmatprep.subr.mxu0 0.0
      %600 = vmatpush1.msra.mxu0 0.0
      %601 = vmatprep.subr.mxu0 0.0
      %602 = vmatpush1.msra.mxu0 0.0
      %603 = vmatprep.subr.mxu0 0.0
      %604 = vmatpush1.msra.mxu0 0.0
      %605 = vmatprep.subr.mxu0 0.0
      %606 = vmatpush1.msra.mxu0 0.0
      %607 = vmatprep.subr.mxu0 0.0
      %608 = vmatpush1.msra.mxu0 0.0
      %609 = vmatprep.subr.mxu0 0.0
      %610 = vmatpush1.msra.mxu0 0.0
      %611 = vmatprep.subr.mxu0 0.0
      %612 = vmatpush1.msra.mxu0 0.0
      %613 = vmatprep.subr.mxu0 0.0
      %614 = vmatpush1.msra.mxu0 0.0
      %615 = vmatprep.subr.mxu0 0.0
      %616 = vmatpush1.msra.mxu0 0.0
      %617 = vmatprep.subr.mxu0 0.0
      %618 = vmatpush1.msra.mxu0 0.0
      %619 = vmatprep.subr.mxu0 0.0
      %620 = vmatpush1.msra.mxu0 0.0
      %621 = vmatprep.subr.mxu0 0.0
      %622 = vmatpush1.msra.mxu0 0.0
      %623 = vmatprep.subr.mxu0 0.0
      %624 = vmatpush1.msra.mxu0 0.0
      %625 = vmatprep.subr.mxu0 0.0
      %626 = vmatpush1.msra.mxu0 %v519
      %627 = vmatprep.subr.mxu0 0.0
      %628 = vmatpush1.msra.mxu0 %v514
      %629 = vmatprep.subr.mxu0 0.0
      %630 = vmatpush2.msra.mxu0 0.0
      %631 = vmatprep.subr.mxu0 0.0
      %632 = vmatpush2.msra.mxu0 0.0
      %633 = vmatprep.subr.mxu0 0.0
      %634 = vmatpush2.msra.mxu0 0.0
      %635 = vmatprep.subr.mxu0 0.0
      %636 = vmatpush2.msra.mxu0 0.0
      %637 = vmatprep.subr.mxu0 0.0
      %638 = vmatpush2.msra.mxu0 0.0
      %639 = vmatprep.subr.mxu0 0.0
      %640 = vmatpush2.msra.mxu0 0.0
      %641 = vmatprep.subr.mxu0 0.0
      %642 = vmatpush2.msra.mxu0 0.0
      %643 = vmatprep.subr.mxu0 0.0
      %644 = vmatpush2.msra.mxu0 0.0
      %645 = vmatprep.subr.mxu0 0.0
      %646 = vmatpush2.msra.mxu0 0.0
      %647 = vmatprep.subr.mxu0 0.0
      %648 = vmatpush2.msra.mxu0 0.0
      %649 = vmatprep.subr.mxu0 0.0
      %650 = vmatpush2.msra.mxu0 0.0
      %651 = vmatprep.subr.mxu0 0.0
      %652 = vmatpush2.msra.mxu0 0.0
      %653 = vmatprep.subr.mxu0 0.0
      %654 = vmatpush2.msra.mxu0 0.0
      %655 = vmatprep.subr.mxu0 0.0
      %656 = vmatpush2.msra.mxu0 0.0
      %657 = vmatprep.subr.mxu0 0.0
      %658 = vmatpush2.msra.mxu0 0.0
      %659 = vmatprep.subr.mxu0 0.0
      %660 = vmatpush2.msra.mxu0 0.0
      %661 = vmatprep.mubr.f32.mxu0 0.0
      %662 = vmatmul.mubr.f32.gmra.mxu0 %v367
      %v663 = vpop.f32.mrf.mxu0
      %v664 = vadd.f32 0.0, %v663
      %v665 = vpop.f32.mrf.mxu0
      %666 = vmatprep.mubr.f32.mxu0 0.0
      %667 = vmatmul.mubr.f32.gmra.mxu0 %v370
      %v668 = vpop.f32.mrf.mxu0
      %v669 = vadd.f32 0.0, %v668
      %v670 = vpop.f32.mrf.mxu0
      %671 = vdwg.mxu0
      %v672 = vmul.f32 %v589, 2.0
      %v673 = vmul.f32 %v594, 2.0
      %v674 = vmul.f32 %v664, 2.0
      %v675 = vmul.f32 %v669, 2.0
      %v676 = vsub.f32 %v672, %v361
      %v677 = vsub.f32 %v673, %v362
      %v678 = vsub.f32 %v674, %v363
      %v679 = vsub.f32 %v675, %v364
      %v680 = vld [vmem:[%s330] sm:$0xff]
      %v681 = vld [vmem:[%s330 + $0x8] sm:$0xff]
      %v682 = vld [vmem:[%s330 + $0x10] sm:$0xff]
      %v683 = vld [vmem:[%s330 + $0x18] sm:$0xff]
      %v684 = vld [vmem:[%s2] sm:$0xff]
      %v685 = vld [vmem:[%s2 + $0x8] sm:$0xff]
      %v686 = vld [vmem:[%s2 + $0x10] sm:$0xff]
      %v687 = vld [vmem:[%s2 + $0x18] sm:$0xff]
      %vm688 = vcmask 261120
      %v690 = vsel %vm688, %v361, 0
      %v693 = vsel %vm688, %v362, 0
      %v696 = vsel %vm688, %v363, 0
      %v699 = vsel %vm688, %v364, 0
      %701 = vmatprep.subr.mxu0 0.0
      %702 = vmatpush1.msra.mxu0 0.0
      %703 = vmatprep.subr.mxu0 0.0
      %704 = vmatpush1.msra.mxu0 0.0
      %705 = vmatprep.subr.mxu0 0.0
      %706 = vmatpush1.msra.mxu0 0.0
      %707 = vmatprep.subr.mxu0 0.0
      %708 = vmatpush1.msra.mxu0 0.0
      %709 = vmatprep.subr.mxu0 0.0
      %710 = vmatpush1.msra.mxu0 0.0
      %711 = vmatprep.subr.mxu0 0.0
      %712 = vmatpush1.msra.mxu0 0.0
      %713 = vmatprep.subr.mxu0 0.0
      %714 = vmatpush1.msra.mxu0 0.0
      %715 = vmatprep.subr.mxu0 0.0
      %716 = vmatpush1.msra.mxu0 0.0
      %717 = vmatprep.subr.mxu0 0.0
      %718 = vmatpush1.msra.mxu0 0.0
      %719 = vmatprep.subr.mxu0 0.0
      %720 = vmatpush1.msra.mxu0 0.0
      %721 = vmatprep.subr.mxu0 0.0
      %722 = vmatpush1.msra.mxu0 0.0
      %723 = vmatprep.subr.mxu0 0.0
      %724 = vmatpush1.msra.mxu0 0.0
      %725 = vmatprep.subr.mxu0 0.0
      %726 = vmatpush1.msra.mxu0 %v687
      %727 = vmatprep.subr.mxu0 0.0
      %728 = vmatpush1.msra.mxu0 %v686
      %729 = vmatprep.subr.mxu0 0.0
      %730 = vmatpush1.msra.mxu0 %v685
      %731 = vmatprep.subr.mxu0 0.0
      %732 = vmatpush1.msra.mxu0 %v684
      %733 = vmatprep.subr.mxu0 0.0
      %734 = vmatpush2.msra.mxu0 0.0
      %735 = vmatprep.subr.mxu0 0.0
      %736 = vmatpush2.msra.mxu0 0.0
      %737 = vmatprep.subr.mxu0 0.0
      %738 = vmatpush2.msra.mxu0 0.0
      %739 = vmatprep.subr.mxu0 0.0
      %740 = vmatpush2.msra.mxu0 0.0
      %741 = vmatprep.subr.mxu0 0.0
      %742 = vmatpush2.msra.mxu0 0.0
      %743 = vmatprep.subr.mxu0 0.0
      %744 = vmatpush2.msra.mxu0 0.0
      %745 = vmatprep.subr.mxu0 0.0
      %746 = vmatpush2.msra.mxu0 0.0
      %747 = vmatprep.subr.mxu0 0.0
      %748 = vmatpush2.msra.mxu0 0.0
      %749 = vmatprep.subr.mxu0 0.0
      %750 = vmatpush2.msra.mxu0 0.0
      %751 = vmatprep.subr.mxu0 0.0
      %752 = vmatpush2.msra.mxu0 0.0
      %753 = vmatprep.subr.mxu0 0.0
      %754 = vmatpush2.msra.mxu0 0.0
      %755 = vmatprep.subr.mxu0 0.0
      %756 = vmatpush2.msra.mxu0 0.0
      %757 = vmatprep.subr.mxu0 0.0
      %758 = vmatpush2.msra.mxu0 0.0
      %759 = vmatprep.subr.mxu0 0.0
      %760 = vmatpush2.msra.mxu0 0.0
      %761 = vmatprep.subr.mxu0 0.0
      %762 = vmatpush2.msra.mxu0 0.0
      %763 = vmatprep.subr.mxu0 0.0
      %764 = vmatpush2.msra.mxu0 0.0
      %765 = vmatprep.mubr.f32.mxu0 0.0
      %766 = vmatmul.mubr.f32.gmra.mxu0 %v690
      %v767 = vpop.f32.mrf.mxu0
      %v768 = vadd.f32 0.0, %v767
      %v769 = vpop.f32.mrf.mxu0
      %770 = vmatprep.mubr.f32.mxu0 0.0
      %771 = vmatmul.mubr.f32.gmra.mxu0 %v693
      %v772 = vpop.f32.mrf.mxu0
      %v773 = vadd.f32 0.0, %v772
      %v774 = vpop.f32.mrf.mxu0
      %775 = vmatprep.mubr.f32.mxu0 0.0
      %776 = vmatmul.mubr.f32.gmra.mxu0 %v696
      %v777 = vpop.f32.mrf.mxu0
      %v778 = vadd.f32 0.0, %v777
      %v779 = vpop.f32.mrf.mxu0
      %780 = vmatprep.mubr.f32.mxu0 0.0
      %781 = vmatmul.mubr.f32.gmra.mxu0 %v699
      %v782 = vpop.f32.mrf.mxu0
      %v783 = vadd.f32 0.0, %v782
      %v784 = vpop.f32.mrf.mxu0
      %785 = vdwg.mxu0
      %v786 = vadd.f32 %v680, %v768
      %v787 = vadd.f32 %v681, %v773
      %v788 = vadd.f32 %v682, %v778
      %v789 = vadd.f32 %v683, %v783
      %s790 = scalar_lea.vmem %s2, 32
      %v791 = vld [vmem:[%s790] sm:$0xff]
      %v792 = vld [vmem:[%s790 + $0x8] sm:$0xff]
      %v793 = vld [vmem:[%s790 + $0x10] sm:$0xff]
      %v794 = vld [vmem:[%s790 + $0x18] sm:$0xff]
      %v796 = vsel %vm688, %v439, 0
      %v799 = vsel %vm688, %v444, 0
      %v802 = vsel %vm688, %v514, 0
      %v805 = vsel %vm688, %v519, 0
      %807 = vmatprep.subr.mxu0 0.0
      %808 = vmatpush1.msra.mxu0 0.0
      %809 = vmatprep.subr.mxu0 0.0
      %810 = vmatpush1.msra.mxu0 0.0
      %811 = vmatprep.subr.mxu0 0.0
      %812 = vmatpush1.msra.mxu0 0.0
      %813 = vmatprep.subr.mxu0 0.0
      %814 = vmatpush1.msra.mxu0 0.0
      %815 = vmatprep.subr.mxu0 0.0
      %816 = vmatpush1.msra.mxu0 0.0
      %817 = vmatprep.subr.mxu0 0.0
      %818 = vmatpush1.msra.mxu0 0.0
      %819 = vmatprep.subr.mxu0 0.0
      %820 = vmatpush1.msra.mxu0 0.0
      %821 = vmatprep.subr.mxu0 0.0
      %822 = vmatpush1.msra.mxu0 0.0
      %823 = vmatprep.subr.mxu0 0.0
      %824 = vmatpush1.msra.mxu0 0.0
      %825 = vmatprep.subr.mxu0 0.0
      %826 = vmatpush1.msra.mxu0 0.0
      %827 = vmatprep.subr.mxu0 0.0
      %828 = vmatpush1.msra.mxu0 0.0
      %829 = vmatprep.subr.mxu0 0.0
      %830 = vmatpush1.msra.mxu0 0.0
      %831 = vmatprep.subr.mxu0 0.0
      %832 = vmatpush1.msra.mxu0 %v794
      %833 = vmatprep.subr.mxu0 0.0
      %834 = vmatpush1.msra.mxu0 %v793
      %835 = vmatprep.subr.mxu0 0.0
      %836 = vmatpush1.msra.mxu0 %v792
      %837 = vmatprep.subr.mxu0 0.0
      %838 = vmatpush1.msra.mxu0 %v791
      %839 = vmatprep.subr.mxu0 0.0
      %840 = vmatpush2.msra.mxu0 0.0
      %841 = vmatprep.subr.mxu0 0.0
      %842 = vmatpush2.msra.mxu0 0.0
      %843 = vmatprep.subr.mxu0 0.0
      %844 = vmatpush2.msra.mxu0 0.0
      %845 = vmatprep.subr.mxu0 0.0
      %846 = vmatpush2.msra.mxu0 0.0
      %847 = vmatprep.subr.mxu0 0.0
      %848 = vmatpush2.msra.mxu0 0.0
      %849 = vmatprep.subr.mxu0 0.0
      %850 = vmatpush2.msra.mxu0 0.0
      %851 = vmatprep.subr.mxu0 0.0
      %852 = vmatpush2.msra.mxu0 0.0
      %853 = vmatprep.subr.mxu0 0.0
      %854 = vmatpush2.msra.mxu0 0.0
      %855 = vmatprep.subr.mxu0 0.0
      %856 = vmatpush2.msra.mxu0 0.0
      %857 = vmatprep.subr.mxu0 0.0
      %858 = vmatpush2.msra.mxu0 0.0
      %859 = vmatprep.subr.mxu0 0.0
      %860 = vmatpush2.msra.mxu0 0.0
      %861 = vmatprep.subr.mxu0 0.0
      %862 = vmatpush2.msra.mxu0 0.0
      %863 = vmatprep.subr.mxu0 0.0
      %864 = vmatpush2.msra.mxu0 0.0
      %865 = vmatprep.subr.mxu0 0.0
      %866 = vmatpush2.msra.mxu0 0.0
      %867 = vmatprep.subr.mxu0 0.0
      %868 = vmatpush2.msra.mxu0 0.0
      %869 = vmatprep.subr.mxu0 0.0
      %870 = vmatpush2.msra.mxu0 0.0
      %871 = vmatprep.mubr.f32.mxu0 0.0
      %872 = vmatmul.mubr.f32.gmra.mxu0 %v796
      %v873 = vpop.f32.mrf.mxu0
      %v874 = vadd.f32 0.0, %v873
      %v875 = vpop.f32.mrf.mxu0
      %876 = vmatprep.mubr.f32.mxu0 0.0
      %877 = vmatmul.mubr.f32.gmra.mxu0 %v799
      %v878 = vpop.f32.mrf.mxu0
      %v879 = vadd.f32 0.0, %v878
      %v880 = vpop.f32.mrf.mxu0
      %881 = vmatprep.mubr.f32.mxu0 0.0
      %882 = vmatmul.mubr.f32.gmra.mxu0 %v802
      %v883 = vpop.f32.mrf.mxu0
      %v884 = vadd.f32 0.0, %v883
      %v885 = vpop.f32.mrf.mxu0
      %886 = vmatprep.mubr.f32.mxu0 0.0
      %887 = vmatmul.mubr.f32.gmra.mxu0 %v805
      %v888 = vpop.f32.mrf.mxu0
      %v889 = vadd.f32 0.0, %v888
      %v890 = vpop.f32.mrf.mxu0
      %891 = vdwg.mxu0
      %v892 = vadd.f32 %v786, %v874
      %v893 = vadd.f32 %v787, %v879
      %v894 = vadd.f32 %v788, %v884
      %v895 = vadd.f32 %v789, %v889
      %s896 = scalar_lea.vmem %s2, 64
      %v897 = vld [vmem:[%s896] sm:$0xff]
      %v898 = vld [vmem:[%s896 + $0x8] sm:$0xff]
      %v899 = vld [vmem:[%s896 + $0x10] sm:$0xff]
      %v900 = vld [vmem:[%s896 + $0x18] sm:$0xff]
      %v902 = vsel %vm688, %v676, 0
      %v905 = vsel %vm688, %v677, 0
      %v908 = vsel %vm688, %v678, 0
      %v911 = vsel %vm688, %v679, 0
      %913 = vmatprep.subr.mxu0 0.0
      %914 = vmatpush1.msra.mxu0 0.0
      %915 = vmatprep.subr.mxu0 0.0
      %916 = vmatpush1.msra.mxu0 0.0
      %917 = vmatprep.subr.mxu0 0.0
      %918 = vmatpush1.msra.mxu0 0.0
      %919 = vmatprep.subr.mxu0 0.0
      %920 = vmatpush1.msra.mxu0 0.0
      %921 = vmatprep.subr.mxu0 0.0
      %922 = vmatpush1.msra.mxu0 0.0
      %923 = vmatprep.subr.mxu0 0.0
      %924 = vmatpush1.msra.mxu0 0.0
      %925 = vmatprep.subr.mxu0 0.0
      %926 = vmatpush1.msra.mxu0 0.0
      %927 = vmatprep.subr.mxu0 0.0
      %928 = vmatpush1.msra.mxu0 0.0
      %929 = vmatprep.subr.mxu0 0.0
      %930 = vmatpush1.msra.mxu0 0.0
      %931 = vmatprep.subr.mxu0 0.0
      %932 = vmatpush1.msra.mxu0 0.0
      %933 = vmatprep.subr.mxu0 0.0
      %934 = vmatpush1.msra.mxu0 0.0
      %935 = vmatprep.subr.mxu0 0.0
      %936 = vmatpush1.msra.mxu0 0.0
      %937 = vmatprep.subr.mxu0 0.0
      %938 = vmatpush1.msra.mxu0 %v900
      %939 = vmatprep.subr.mxu0 0.0
      %940 = vmatpush1.msra.mxu0 %v899
      %941 = vmatprep.subr.mxu0 0.0
      %942 = vmatpush1.msra.mxu0 %v898
      %943 = vmatprep.subr.mxu0 0.0
      %944 = vmatpush1.msra.mxu0 %v897
      %945 = vmatprep.subr.mxu0 0.0
      %946 = vmatpush2.msra.mxu0 0.0
      %947 = vmatprep.subr.mxu0 0.0
      %948 = vmatpush2.msra.mxu0 0.0
      %949 = vmatprep.subr.mxu0 0.0
      %950 = vmatpush2.msra.mxu0 0.0
      %951 = vmatprep.subr.mxu0 0.0
      %952 = vmatpush2.msra.mxu0 0.0
      %953 = vmatprep.subr.mxu0 0.0
      %954 = vmatpush2.msra.mxu0 0.0
      %955 = vmatprep.subr.mxu0 0.0
      %956 = vmatpush2.msra.mxu0 0.0
      %957 = vmatprep.subr.mxu0 0.0
      %958 = vmatpush2.msra.mxu0 0.0
      %959 = vmatprep.subr.mxu0 0.0
      %960 = vmatpush2.msra.mxu0 0.0
      %961 = vmatprep.subr.mxu0 0.0
      %962 = vmatpush2.msra.mxu0 0.0
      %963 = vmatprep.subr.mxu0 0.0
      %964 = vmatpush2.msra.mxu0 0.0
      %965 = vmatprep.subr.mxu0 0.0
      %966 = vmatpush2.msra.mxu0 0.0
      %967 = vmatprep.subr.mxu0 0.0
      %968 = vmatpush2.msra.mxu0 0.0
      %969 = vmatprep.subr.mxu0 0.0
      %970 = vmatpush2.msra.mxu0 0.0
      %971 = vmatprep.subr.mxu0 0.0
      %972 = vmatpush2.msra.mxu0 0.0
      %973 = vmatprep.subr.mxu0 0.0
      %974 = vmatpush2.msra.mxu0 0.0
      %975 = vmatprep.subr.mxu0 0.0
      %976 = vmatpush2.msra.mxu0 0.0
      %977 = vmatprep.mubr.f32.mxu0 0.0
      %978 = vmatmul.mubr.f32.gmra.mxu0 %v902
      %v979 = vpop.f32.mrf.mxu0
      %v980 = vadd.f32 0.0, %v979
      %v981 = vpop.f32.mrf.mxu0
      %982 = vmatprep.mubr.f32.mxu0 0.0
      %983 = vmatmul.mubr.f32.gmra.mxu0 %v905
      %v984 = vpop.f32.mrf.mxu0
      %v985 = vadd.f32 0.0, %v984
      %v986 = vpop.f32.mrf.mxu0
      %987 = vmatprep.mubr.f32.mxu0 0.0
      %988 = vmatmul.mubr.f32.gmra.mxu0 %v908
      %v989 = vpop.f32.mrf.mxu0
      %v990 = vadd.f32 0.0, %v989
      %v991 = vpop.f32.mrf.mxu0
      %992 = vmatprep.mubr.f32.mxu0 0.0
      %993 = vmatmul.mubr.f32.gmra.mxu0 %v911
      %v994 = vpop.f32.mrf.mxu0
      %v995 = vadd.f32 0.0, %v994
      %v996 = vpop.f32.mrf.mxu0
      %997 = vdwg.mxu0
      %v998 = vadd.f32 %v892, %v980
      %v999 = vadd.f32 %v893, %v985
      %v1000 = vadd.f32 %v894, %v990
      %v1001 = vadd.f32 %v895, %v995
      %v1002 = vmul.f32 %v998, 0.5
      %v1003 = vmul.f32 %v999, 0.5
      %v1004 = vmul.f32 %v1000, 0.5
      %v1005 = vmul.f32 %v1001, 0.5
      %v1006 = vtanh.pop %v1002
      %v1007 = vtanh.pop %v1003
      %v1008 = vtanh.pop %v1004
      %v1009 = vtanh.pop %v1005
      %v1010 = vadd.f32 %v1006, 1.0
      %v1011 = vadd.f32 %v1007, 1.0
      %v1012 = vadd.f32 %v1008, 1.0
      %v1013 = vadd.f32 %v1009, 1.0
      %v1014 = vmul.f32 %v1010, 0.5
      %v1015 = vmul.f32 %v1011, 0.5
      %v1016 = vmul.f32 %v1012, 0.5
      %v1017 = vmul.f32 %v1013, 0.5
      %v1018 = vld [vmem:[%s335] sm:$0xff]
      %v1019 = vld [vmem:[%s335 + $0x8] sm:$0xff]
      %v1020 = vld [vmem:[%s335 + $0x10] sm:$0xff]
      %v1021 = vld [vmem:[%s335 + $0x18] sm:$0xff]
      %v1022 = vld [vmem:[%s3] sm:$0xff]
      %v1023 = vld [vmem:[%s3 + $0x8] sm:$0xff]
      %v1024 = vld [vmem:[%s3 + $0x10] sm:$0xff]
      %v1025 = vld [vmem:[%s3 + $0x18] sm:$0xff]
      %1026 = vmatprep.subr.mxu0 0.0
      %1027 = vmatpush1.msra.mxu0 0.0
      %1028 = vmatprep.subr.mxu0 0.0
      %1029 = vmatpush1.msra.mxu0 0.0
      %1030 = vmatprep.subr.mxu0 0.0
      %1031 = vmatpush1.msra.mxu0 0.0
      %1032 = vmatprep.subr.mxu0 0.0
      %1033 = vmatpush1.msra.mxu0 0.0
      %1034 = vmatprep.subr.mxu0 0.0
      %1035 = vmatpush1.msra.mxu0 0.0
      %1036 = vmatprep.subr.mxu0 0.0
      %1037 = vmatpush1.msra.mxu0 0.0
      %1038 = vmatprep.subr.mxu0 0.0
      %1039 = vmatpush1.msra.mxu0 0.0
      %1040 = vmatprep.subr.mxu0 0.0
      %1041 = vmatpush1.msra.mxu0 0.0
      %1042 = vmatprep.subr.mxu0 0.0
      %1043 = vmatpush1.msra.mxu0 0.0
      %1044 = vmatprep.subr.mxu0 0.0
      %1045 = vmatpush1.msra.mxu0 0.0
      %1046 = vmatprep.subr.mxu0 0.0
      %1047 = vmatpush1.msra.mxu0 0.0
      %1048 = vmatprep.subr.mxu0 0.0
      %1049 = vmatpush1.msra.mxu0 0.0
      %1050 = vmatprep.subr.mxu0 0.0
      %1051 = vmatpush1.msra.mxu0 %v1025
      %1052 = vmatprep.subr.mxu0 0.0
      %1053 = vmatpush1.msra.mxu0 %v1024
      %1054 = vmatprep.subr.mxu0 0.0
      %1055 = vmatpush1.msra.mxu0 %v1023
      %1056 = vmatprep.subr.mxu0 0.0
      %1057 = vmatpush1.msra.mxu0 %v1022
      %1058 = vmatprep.subr.mxu0 0.0
      %1059 = vmatpush2.msra.mxu0 0.0
      %1060 = vmatprep.subr.mxu0 0.0
      %1061 = vmatpush2.msra.mxu0 0.0
      %1062 = vmatprep.subr.mxu0 0.0
      %1063 = vmatpush2.msra.mxu0 0.0
      %1064 = vmatprep.subr.mxu0 0.0
      %1065 = vmatpush2.msra.mxu0 0.0
      %1066 = vmatprep.subr.mxu0 0.0
      %1067 = vmatpush2.msra.mxu0 0.0
      %1068 = vmatprep.subr.mxu0 0.0
      %1069 = vmatpush2.msra.mxu0 0.0
      %1070 = vmatprep.subr.mxu0 0.0
      %1071 = vmatpush2.msra.mxu0 0.0
      %1072 = vmatprep.subr.mxu0 0.0
      %1073 = vmatpush2.msra.mxu0 0.0
      %1074 = vmatprep.subr.mxu0 0.0
      %1075 = vmatpush2.msra.mxu0 0.0
      %1076 = vmatprep.subr.mxu0 0.0
      %1077 = vmatpush2.msra.mxu0 0.0
      %1078 = vmatprep.subr.mxu0 0.0
      %1079 = vmatpush2.msra.mxu0 0.0
      %1080 = vmatprep.subr.mxu0 0.0
      %1081 = vmatpush2.msra.mxu0 0.0
      %1082 = vmatprep.subr.mxu0 0.0
      %1083 = vmatpush2.msra.mxu0 0.0
      %1084 = vmatprep.subr.mxu0 0.0
      %1085 = vmatpush2.msra.mxu0 0.0
      %1086 = vmatprep.subr.mxu0 0.0
      %1087 = vmatpush2.msra.mxu0 0.0
      %1088 = vmatprep.subr.mxu0 0.0
      %1089 = vmatpush2.msra.mxu0 0.0
      %1090 = vmatprep.mubr.f32.mxu0 0.0
      %1091 = vmatmul.mubr.f32.gmra.mxu0 %v690
      %v1092 = vpop.f32.mrf.mxu0
      %v1093 = vadd.f32 0.0, %v1092
      %v1094 = vpop.f32.mrf.mxu0
      %1095 = vmatprep.mubr.f32.mxu0 0.0
      %1096 = vmatmul.mubr.f32.gmra.mxu0 %v693
      %v1097 = vpop.f32.mrf.mxu0
      %v1098 = vadd.f32 0.0, %v1097
      %v1099 = vpop.f32.mrf.mxu0
      %1100 = vmatprep.mubr.f32.mxu0 0.0
      %1101 = vmatmul.mubr.f32.gmra.mxu0 %v696
      %v1102 = vpop.f32.mrf.mxu0
      %v1103 = vadd.f32 0.0, %v1102
      %v1104 = vpop.f32.mrf.mxu0
      %1105 = vmatprep.mubr.f32.mxu0 0.0
      %1106 = vmatmul.mubr.f32.gmra.mxu0 %v699
      %v1107 = vpop.f32.mrf.mxu0
      %v1108 = vadd.f32 0.0, %v1107
      %v1109 = vpop.f32.mrf.mxu0
      %1110 = vdwg.mxu0
      %v1111 = vadd.f32 %v1018, %v1093
      %v1112 = vadd.f32 %v1019, %v1098
      %v1113 = vadd.f32 %v1020, %v1103
      %v1114 = vadd.f32 %v1021, %v1108
      %s1115 = scalar_lea.vmem %s3, 32
      %v1116 = vld [vmem:[%s1115] sm:$0xff]
      %v1117 = vld [vmem:[%s1115 + $0x8] sm:$0xff]
      %v1118 = vld [vmem:[%s1115 + $0x10] sm:$0xff]
      %v1119 = vld [vmem:[%s1115 + $0x18] sm:$0xff]
      %1120 = vmatprep.subr.mxu0 0.0
      %1121 = vmatpush1.msra.mxu0 0.0
      %1122 = vmatprep.subr.mxu0 0.0
      %1123 = vmatpush1.msra.mxu0 0.0
      %1124 = vmatprep.subr.mxu0 0.0
      %1125 = vmatpush1.msra.mxu0 0.0
      %1126 = vmatprep.subr.mxu0 0.0
      %1127 = vmatpush1.msra.mxu0 0.0
      %1128 = vmatprep.subr.mxu0 0.0
      %1129 = vmatpush1.msra.mxu0 0.0
      %1130 = vmatprep.subr.mxu0 0.0
      %1131 = vmatpush1.msra.mxu0 0.0
      %1132 = vmatprep.subr.mxu0 0.0
      %1133 = vmatpush1.msra.mxu0 0.0
      %1134 = vmatprep.subr.mxu0 0.0
      %1135 = vmatpush1.msra.mxu0 0.0
      %1136 = vmatprep.subr.mxu0 0.0
      %1137 = vmatpush1.msra.mxu0 0.0
      %1138 = vmatprep.subr.mxu0 0.0
      %1139 = vmatpush1.msra.mxu0 0.0
      %1140 = vmatprep.subr.mxu0 0.0
      %1141 = vmatpush1.msra.mxu0 0.0
      %1142 = vmatprep.subr.mxu0 0.0
      %1143 = vmatpush1.msra.mxu0 0.0
      %1144 = vmatprep.subr.mxu0 0.0
      %1145 = vmatpush1.msra.mxu0 %v1119
      %1146 = vmatprep.subr.mxu0 0.0
      %1147 = vmatpush1.msra.mxu0 %v1118
      %1148 = vmatprep.subr.mxu0 0.0
      %1149 = vmatpush1.msra.mxu0 %v1117
      %1150 = vmatprep.subr.mxu0 0.0
      %1151 = vmatpush1.msra.mxu0 %v1116
      %1152 = vmatprep.subr.mxu0 0.0
      %1153 = vmatpush2.msra.mxu0 0.0
      %1154 = vmatprep.subr.mxu0 0.0
      %1155 = vmatpush2.msra.mxu0 0.0
      %1156 = vmatprep.subr.mxu0 0.0
      %1157 = vmatpush2.msra.mxu0 0.0
      %1158 = vmatprep.subr.mxu0 0.0
      %1159 = vmatpush2.msra.mxu0 0.0
      %1160 = vmatprep.subr.mxu0 0.0
      %1161 = vmatpush2.msra.mxu0 0.0
      %1162 = vmatprep.subr.mxu0 0.0
      %1163 = vmatpush2.msra.mxu0 0.0
      %1164 = vmatprep.subr.mxu0 0.0
      %1165 = vmatpush2.msra.mxu0 0.0
      %1166 = vmatprep.subr.mxu0 0.0
      %1167 = vmatpush2.msra.mxu0 0.0
      %1168 = vmatprep.subr.mxu0 0.0
      %1169 = vmatpush2.msra.mxu0 0.0
      %1170 = vmatprep.subr.mxu0 0.0
      %1171 = vmatpush2.msra.mxu0 0.0
      %1172 = vmatprep.subr.mxu0 0.0
      %1173 = vmatpush2.msra.mxu0 0.0
      %1174 = vmatprep.subr.mxu0 0.0
      %1175 = vmatpush2.msra.mxu0 0.0
      %1176 = vmatprep.subr.mxu0 0.0
      %1177 = vmatpush2.msra.mxu0 0.0
      %1178 = vmatprep.subr.mxu0 0.0
      %1179 = vmatpush2.msra.mxu0 0.0
      %1180 = vmatprep.subr.mxu0 0.0
      %1181 = vmatpush2.msra.mxu0 0.0
      %1182 = vmatprep.subr.mxu0 0.0
      %1183 = vmatpush2.msra.mxu0 0.0
      %1184 = vmatprep.mubr.f32.mxu0 0.0
      %1185 = vmatmul.mubr.f32.gmra.mxu0 %v796
      %v1186 = vpop.f32.mrf.mxu0
      %v1187 = vadd.f32 0.0, %v1186
      %v1188 = vpop.f32.mrf.mxu0
      %1189 = vmatprep.mubr.f32.mxu0 0.0
      %1190 = vmatmul.mubr.f32.gmra.mxu0 %v799
      %v1191 = vpop.f32.mrf.mxu0
      %v1192 = vadd.f32 0.0, %v1191
      %v1193 = vpop.f32.mrf.mxu0
      %1194 = vmatprep.mubr.f32.mxu0 0.0
      %1195 = vmatmul.mubr.f32.gmra.mxu0 %v802
      %v1196 = vpop.f32.mrf.mxu0
      %v1197 = vadd.f32 0.0, %v1196
      %v1198 = vpop.f32.mrf.mxu0
      %1199 = vmatprep.mubr.f32.mxu0 0.0
      %1200 = vmatmul.mubr.f32.gmra.mxu0 %v805
      %v1201 = vpop.f32.mrf.mxu0
      %v1202 = vadd.f32 0.0, %v1201
      %v1203 = vpop.f32.mrf.mxu0
      %1204 = vdwg.mxu0
      %v1205 = vadd.f32 %v1111, %v1187
      %v1206 = vadd.f32 %v1112, %v1192
      %v1207 = vadd.f32 %v1113, %v1197
      %v1208 = vadd.f32 %v1114, %v1202
      %s1209 = scalar_lea.vmem %s3, 64
      %v1210 = vld [vmem:[%s1209] sm:$0xff]
      %v1211 = vld [vmem:[%s1209 + $0x8] sm:$0xff]
      %v1212 = vld [vmem:[%s1209 + $0x10] sm:$0xff]
      %v1213 = vld [vmem:[%s1209 + $0x18] sm:$0xff]
      %1214 = vmatprep.subr.mxu0 0.0
      %1215 = vmatpush1.msra.mxu0 0.0
      %1216 = vmatprep.subr.mxu0 0.0
      %1217 = vmatpush1.msra.mxu0 0.0
      %1218 = vmatprep.subr.mxu0 0.0
      %1219 = vmatpush1.msra.mxu0 0.0
      %1220 = vmatprep.subr.mxu0 0.0
      %1221 = vmatpush1.msra.mxu0 0.0
      %1222 = vmatprep.subr.mxu0 0.0
      %1223 = vmatpush1.msra.mxu0 0.0
      %1224 = vmatprep.subr.mxu0 0.0
      %1225 = vmatpush1.msra.mxu0 0.0
      %1226 = vmatprep.subr.mxu0 0.0
      %1227 = vmatpush1.msra.mxu0 0.0
      %1228 = vmatprep.subr.mxu0 0.0
      %1229 = vmatpush1.msra.mxu0 0.0
      %1230 = vmatprep.subr.mxu0 0.0
      %1231 = vmatpush1.msra.mxu0 0.0
      %1232 = vmatprep.subr.mxu0 0.0
      %1233 = vmatpush1.msra.mxu0 0.0
      %1234 = vmatprep.subr.mxu0 0.0
      %1235 = vmatpush1.msra.mxu0 0.0
      %1236 = vmatprep.subr.mxu0 0.0
      %1237 = vmatpush1.msra.mxu0 0.0
      %1238 = vmatprep.subr.mxu0 0.0
      %1239 = vmatpush1.msra.mxu0 %v1213
      %1240 = vmatprep.subr.mxu0 0.0
      %1241 = vmatpush1.msra.mxu0 %v1212
      %1242 = vmatprep.subr.mxu0 0.0
      %1243 = vmatpush1.msra.mxu0 %v1211
      %1244 = vmatprep.subr.mxu0 0.0
      %1245 = vmatpush1.msra.mxu0 %v1210
      %1246 = vmatprep.subr.mxu0 0.0
      %1247 = vmatpush2.msra.mxu0 0.0
      %1248 = vmatprep.subr.mxu0 0.0
      %1249 = vmatpush2.msra.mxu0 0.0
      %1250 = vmatprep.subr.mxu0 0.0
      %1251 = vmatpush2.msra.mxu0 0.0
      %1252 = vmatprep.subr.mxu0 0.0
      %1253 = vmatpush2.msra.mxu0 0.0
      %1254 = vmatprep.subr.mxu0 0.0
      %1255 = vmatpush2.msra.mxu0 0.0
      %1256 = vmatprep.subr.mxu0 0.0
      %1257 = vmatpush2.msra.mxu0 0.0
      %1258 = vmatprep.subr.mxu0 0.0
      %1259 = vmatpush2.msra.mxu0 0.0
      %1260 = vmatprep.subr.mxu0 0.0
      %1261 = vmatpush2.msra.mxu0 0.0
      %1262 = vmatprep.subr.mxu0 0.0
      %1263 = vmatpush2.msra.mxu0 0.0
      %1264 = vmatprep.subr.mxu0 0.0
      %1265 = vmatpush2.msra.mxu0 0.0
      %1266 = vmatprep.subr.mxu0 0.0
      %1267 = vmatpush2.msra.mxu0 0.0
      %1268 = vmatprep.subr.mxu0 0.0
      %1269 = vmatpush2.msra.mxu0 0.0
      %1270 = vmatprep.subr.mxu0 0.0
      %1271 = vmatpush2.msra.mxu0 0.0
      %1272 = vmatprep.subr.mxu0 0.0
      %1273 = vmatpush2.msra.mxu0 0.0
      %1274 = vmatprep.subr.mxu0 0.0
      %1275 = vmatpush2.msra.mxu0 0.0
      %1276 = vmatprep.subr.mxu0 0.0
      %1277 = vmatpush2.msra.mxu0 0.0
      %1278 = vmatprep.mubr.f32.mxu0 0.0
      %1279 = vmatmul.mubr.f32.gmra.mxu0 %v902
      %v1280 = vpop.f32.mrf.mxu0
      %v1281 = vadd.f32 0.0, %v1280
      %v1282 = vpop.f32.mrf.mxu0
      %1283 = vmatprep.mubr.f32.mxu0 0.0
      %1284 = vmatmul.mubr.f32.gmra.mxu0 %v905
      %v1285 = vpop.f32.mrf.mxu0
      %v1286 = vadd.f32 0.0, %v1285
      %v1287 = vpop.f32.mrf.mxu0
      %1288 = vmatprep.mubr.f32.mxu0 0.0
      %1289 = vmatmul.mubr.f32.gmra.mxu0 %v908
      %v1290 = vpop.f32.mrf.mxu0
      %v1291 = vadd.f32 0.0, %v1290
      %v1292 = vpop.f32.mrf.mxu0
      %1293 = vmatprep.mubr.f32.mxu0 0.0
      %1294 = vmatmul.mubr.f32.gmra.mxu0 %v911
      %v1295 = vpop.f32.mrf.mxu0
      %v1296 = vadd.f32 0.0, %v1295
      %v1297 = vpop.f32.mrf.mxu0
      %1298 = vdwg.mxu0
      %v1299 = vadd.f32 %v1205, %v1281
      %v1300 = vadd.f32 %v1206, %v1286
      %v1301 = vadd.f32 %v1207, %v1291
      %v1302 = vadd.f32 %v1208, %v1296
      %v1303 = vmul.f32 %v1299, 0.5
      %v1304 = vmul.f32 %v1300, 0.5
      %v1305 = vmul.f32 %v1301, 0.5
      %v1306 = vmul.f32 %v1302, 0.5
      %v1307 = vtanh.pop %v1303
      %v1308 = vtanh.pop %v1304
      %v1309 = vtanh.pop %v1305
      %v1310 = vtanh.pop %v1306
      %v1311 = vadd.f32 %v1307, 1.0
      %v1312 = vadd.f32 %v1308, 1.0
      %v1313 = vadd.f32 %v1309, 1.0
      %v1314 = vadd.f32 %v1310, 1.0
      %v1315 = vmul.f32 %v1311, 0.5
      %v1316 = vmul.f32 %v1312, 0.5
      %v1317 = vmul.f32 %v1313, 0.5
      %v1318 = vmul.f32 %v1314, 0.5
      %v1319 = vmul.f32 %v1014, %v361
      %v1320 = vmul.f32 %v1015, %v362
      %v1321 = vmul.f32 %v1016, %v363
      %v1322 = vmul.f32 %v1017, %v364
      %1323 = vmatprep.subr.mxu0 0.0
      %1324 = vmatpush1.msra.mxu0 0.0
      %1325 = vmatprep.subr.mxu0 0.0
      %1326 = vmatpush1.msra.mxu0 0.0
      %1327 = vmatprep.subr.mxu0 0.0
      %1328 = vmatpush1.msra.mxu0 0.0
      %1329 = vmatprep.subr.mxu0 0.0
      %1330 = vmatpush1.msra.mxu0 0.0
      %1331 = vmatprep.subr.mxu0 0.0
      %1332 = vmatpush1.msra.mxu0 0.0
      %1333 = vmatprep.subr.mxu0 0.0
      %1334 = vmatpush1.msra.mxu0 0.0
      %1335 = vmatprep.subr.mxu0 0.0
      %1336 = vmatpush1.msra.mxu0 0.0
      %1337 = vmatprep.subr.mxu0 0.0
      %1338 = vmatpush1.msra.mxu0 0.0
      %1339 = vmatprep.subr.mxu0 0.0
      %1340 = vmatpush1.msra.mxu0 0.0
      %1341 = vmatprep.subr.mxu0 0.0
      %1342 = vmatpush1.msra.mxu0 0.0
      %1343 = vmatprep.subr.mxu0 0.0
      %1344 = vmatpush1.msra.mxu0 0.0
      %1345 = vmatprep.subr.mxu0 0.0
      %1346 = vmatpush1.msra.mxu0 0.0
      %1347 = vmatprep.subr.mxu0 0.0
      %1348 = vmatpush1.msra.mxu0 0.0
      %1349 = vmatprep.subr.mxu0 0.0
      %1350 = vmatpush1.msra.mxu0 0.0
      %1351 = vmatprep.subr.mxu0 0.0
      %1352 = vmatpush1.msra.mxu0 %v1320
      %1353 = vmatprep.subr.mxu0 0.0
      %1354 = vmatpush1.msra.mxu0 %v1319
      %1355 = vmatprep.subr.mxu0 0.0
      %1356 = vmatpush2.msra.mxu0 0.0
      %1357 = vmatprep.subr.mxu0 0.0
      %1358 = vmatpush2.msra.mxu0 0.0
      %1359 = vmatprep.subr.mxu0 0.0
      %1360 = vmatpush2.msra.mxu0 0.0
      %1361 = vmatprep.subr.mxu0 0.0
      %1362 = vmatpush2.msra.mxu0 0.0
      %1363 = vmatprep.subr.mxu0 0.0
      %1364 = vmatpush2.msra.mxu0 0.0
      %1365 = vmatprep.subr.mxu0 0.0
      %1366 = vmatpush2.msra.mxu0 0.0
      %1367 = vmatprep.subr.mxu0 0.0
      %1368 = vmatpush2.msra.mxu0 0.0
      %1369 = vmatprep.subr.mxu0 0.0
      %1370 = vmatpush2.msra.mxu0 0.0
      %1371 = vmatprep.subr.mxu0 0.0
      %1372 = vmatpush2.msra.mxu0 0.0
      %1373 = vmatprep.subr.mxu0 0.0
      %1374 = vmatpush2.msra.mxu0 0.0
      %1375 = vmatprep.subr.mxu0 0.0
      %1376 = vmatpush2.msra.mxu0 0.0
      %1377 = vmatprep.subr.mxu0 0.0
      %1378 = vmatpush2.msra.mxu0 0.0
      %1379 = vmatprep.subr.mxu0 0.0
      %1380 = vmatpush2.msra.mxu0 0.0
      %1381 = vmatprep.subr.mxu0 0.0
      %1382 = vmatpush2.msra.mxu0 0.0
      %1383 = vmatprep.subr.mxu0 0.0
      %1384 = vmatpush2.msra.mxu0 0.0
      %1385 = vmatprep.subr.mxu0 0.0
      %1386 = vmatpush2.msra.mxu0 0.0
      %1387 = vmatprep.mubr.f32.mxu0 0.0
      %1388 = vmatmul.mubr.f32.gmra.mxu0 %v367
      %v1389 = vpop.f32.mrf.mxu0
      %v1390 = vadd.f32 0.0, %v1389
      %v1391 = vpop.f32.mrf.mxu0
      %1392 = vmatprep.mubr.f32.mxu0 0.0
      %1393 = vmatmul.mubr.f32.gmra.mxu0 %v370
      %v1394 = vpop.f32.mrf.mxu0
      %v1395 = vadd.f32 0.0, %v1394
      %v1396 = vpop.f32.mrf.mxu0
      %1397 = vdwg.mxu0
      %1398 = vmatprep.subr.mxu0 0.0
      %1399 = vmatpush1.msra.mxu0 0.0
      %1400 = vmatprep.subr.mxu0 0.0
      %1401 = vmatpush1.msra.mxu0 0.0
      %1402 = vmatprep.subr.mxu0 0.0
      %1403 = vmatpush1.msra.mxu0 0.0
      %1404 = vmatprep.subr.mxu0 0.0
      %1405 = vmatpush1.msra.mxu0 0.0
      %1406 = vmatprep.subr.mxu0 0.0
      %1407 = vmatpush1.msra.mxu0 0.0
      %1408 = vmatprep.subr.mxu0 0.0
      %1409 = vmatpush1.msra.mxu0 0.0
      %1410 = vmatprep.subr.mxu0 0.0
      %1411 = vmatpush1.msra.mxu0 0.0
      %1412 = vmatprep.subr.mxu0 0.0
      %1413 = vmatpush1.msra.mxu0 0.0
      %1414 = vmatprep.subr.mxu0 0.0
      %1415 = vmatpush1.msra.mxu0 0.0
      %1416 = vmatprep.subr.mxu0 0.0
      %1417 = vmatpush1.msra.mxu0 0.0
      %1418 = vmatprep.subr.mxu0 0.0
      %1419 = vmatpush1.msra.mxu0 0.0
      %1420 = vmatprep.subr.mxu0 0.0
      %1421 = vmatpush1.msra.mxu0 0.0
      %1422 = vmatprep.subr.mxu0 0.0
      %1423 = vmatpush1.msra.mxu0 0.0
      %1424 = vmatprep.subr.mxu0 0.0
      %1425 = vmatpush1.msra.mxu0 0.0
      %1426 = vmatprep.subr.mxu0 0.0
      %1427 = vmatpush1.msra.mxu0 %v1322
      %1428 = vmatprep.subr.mxu0 0.0
      %1429 = vmatpush1.msra.mxu0 %v1321
      %1430 = vmatprep.subr.mxu0 0.0
      %1431 = vmatpush2.msra.mxu0 0.0
      %1432 = vmatprep.subr.mxu0 0.0
      %1433 = vmatpush2.msra.mxu0 0.0
      %1434 = vmatprep.subr.mxu0 0.0
      %1435 = vmatpush2.msra.mxu0 0.0
      %1436 = vmatprep.subr.mxu0 0.0
      %1437 = vmatpush2.msra.mxu0 0.0
      %1438 = vmatprep.subr.mxu0 0.0
      %1439 = vmatpush2.msra.mxu0 0.0
      %1440 = vmatprep.subr.mxu0 0.0
      %1441 = vmatpush2.msra.mxu0 0.0
      %1442 = vmatprep.subr.mxu0 0.0
      %1443 = vmatpush2.msra.mxu0 0.0
      %1444 = vmatprep.subr.mxu0 0.0
      %1445 = vmatpush2.msra.mxu0 0.0
      %1446 = vmatprep.subr.mxu0 0.0
      %1447 = vmatpush2.msra.mxu0 0.0
      %1448 = vmatprep.subr.mxu0 0.0
      %1449 = vmatpush2.msra.mxu0 0.0
      %1450 = vmatprep.subr.mxu0 0.0
      %1451 = vmatpush2.msra.mxu0 0.0
      %1452 = vmatprep.subr.mxu0 0.0
      %1453 = vmatpush2.msra.mxu0 0.0
      %1454 = vmatprep.subr.mxu0 0.0
      %1455 = vmatpush2.msra.mxu0 0.0
      %1456 = vmatprep.subr.mxu0 0.0
      %1457 = vmatpush2.msra.mxu0 0.0
      %1458 = vmatprep.subr.mxu0 0.0
      %1459 = vmatpush2.msra.mxu0 0.0
      %1460 = vmatprep.subr.mxu0 0.0
      %1461 = vmatpush2.msra.mxu0 0.0
      %1462 = vmatprep.mubr.f32.mxu0 0.0
      %1463 = vmatmul.mubr.f32.gmra.mxu0 %v367
      %v1464 = vpop.f32.mrf.mxu0
      %v1465 = vadd.f32 0.0, %v1464
      %v1466 = vpop.f32.mrf.mxu0
      %1467 = vmatprep.mubr.f32.mxu0 0.0
      %1468 = vmatmul.mubr.f32.gmra.mxu0 %v370
      %v1469 = vpop.f32.mrf.mxu0
      %v1470 = vadd.f32 0.0, %v1469
      %v1471 = vpop.f32.mrf.mxu0
      %1472 = vdwg.mxu0
      %1473 = vmatprep.subr.mxu0 0.0
      %1474 = vmatpush1.msra.mxu0 0.0
      %1475 = vmatprep.subr.mxu0 0.0
      %1476 = vmatpush1.msra.mxu0 0.0
      %1477 = vmatprep.subr.mxu0 0.0
      %1478 = vmatpush1.msra.mxu0 0.0
      %1479 = vmatprep.subr.mxu0 0.0
      %1480 = vmatpush1.msra.mxu0 0.0
      %1481 = vmatprep.subr.mxu0 0.0
      %1482 = vmatpush1.msra.mxu0 0.0
      %1483 = vmatprep.subr.mxu0 0.0
      %1484 = vmatpush1.msra.mxu0 0.0
      %1485 = vmatprep.subr.mxu0 0.0
      %1486 = vmatpush1.msra.mxu0 0.0
      %1487 = vmatprep.subr.mxu0 0.0
      %1488 = vmatpush1.msra.mxu0 0.0
      %1489 = vmatprep.subr.mxu0 0.0
      %1490 = vmatpush1.msra.mxu0 0.0
      %1491 = vmatprep.subr.mxu0 0.0
      %1492 = vmatpush1.msra.mxu0 0.0
      %1493 = vmatprep.subr.mxu0 0.0
      %1494 = vmatpush1.msra.mxu0 0.0
      %1495 = vmatprep.subr.mxu0 0.0
      %1496 = vmatpush1.msra.mxu0 0.0
      %1497 = vmatprep.subr.mxu0 0.0
      %1498 = vmatpush1.msra.mxu0 0.0
      %1499 = vmatprep.subr.mxu0 0.0
      %1500 = vmatpush1.msra.mxu0 0.0
      %1501 = vmatprep.subr.mxu0 0.0
      %1502 = vmatpush1.msra.mxu0 %v1395
      %1503 = vmatprep.subr.mxu0 0.0
      %1504 = vmatpush1.msra.mxu0 %v1390
      %1505 = vmatprep.subr.mxu0 0.0
      %1506 = vmatpush2.msra.mxu0 0.0
      %1507 = vmatprep.subr.mxu0 0.0
      %1508 = vmatpush2.msra.mxu0 0.0
      %1509 = vmatprep.subr.mxu0 0.0
      %1510 = vmatpush2.msra.mxu0 0.0
      %1511 = vmatprep.subr.mxu0 0.0
      %1512 = vmatpush2.msra.mxu0 0.0
      %1513 = vmatprep.subr.mxu0 0.0
      %1514 = vmatpush2.msra.mxu0 0.0
      %1515 = vmatprep.subr.mxu0 0.0
      %1516 = vmatpush2.msra.mxu0 0.0
      %1517 = vmatprep.subr.mxu0 0.0
      %1518 = vmatpush2.msra.mxu0 0.0
      %1519 = vmatprep.subr.mxu0 0.0
      %1520 = vmatpush2.msra.mxu0 0.0
      %1521 = vmatprep.subr.mxu0 0.0
      %1522 = vmatpush2.msra.mxu0 0.0
      %1523 = vmatprep.subr.mxu0 0.0
      %1524 = vmatpush2.msra.mxu0 0.0
      %1525 = vmatprep.subr.mxu0 0.0
      %1526 = vmatpush2.msra.mxu0 0.0
      %1527 = vmatprep.subr.mxu0 0.0
      %1528 = vmatpush2.msra.mxu0 0.0
      %1529 = vmatprep.subr.mxu0 0.0
      %1530 = vmatpush2.msra.mxu0 0.0
      %1531 = vmatprep.subr.mxu0 0.0
      %1532 = vmatpush2.msra.mxu0 0.0
      %1533 = vmatprep.subr.mxu0 0.0
      %1534 = vmatpush2.msra.mxu0 0.0
      %1535 = vmatprep.subr.mxu0 0.0
      %1536 = vmatpush2.msra.mxu0 0.0
      %1537 = vmatprep.mubr.f32.mxu0 0.0
      %1538 = vmatmul.mubr.f32.gmra.mxu0 %v367
      %v1539 = vpop.f32.mrf.mxu0
      %v1540 = vadd.f32 0.0, %v1539
      %v1541 = vpop.f32.mrf.mxu0
      %1542 = vmatprep.mubr.f32.mxu0 0.0
      %1543 = vmatmul.mubr.f32.gmra.mxu0 %v370
      %v1544 = vpop.f32.mrf.mxu0
      %v1545 = vadd.f32 0.0, %v1544
      %v1546 = vpop.f32.mrf.mxu0
      %1547 = vdwg.mxu0
      %1548 = vmatprep.subr.mxu0 0.0
      %1549 = vmatpush1.msra.mxu0 0.0
      %1550 = vmatprep.subr.mxu0 0.0
      %1551 = vmatpush1.msra.mxu0 0.0
      %1552 = vmatprep.subr.mxu0 0.0
      %1553 = vmatpush1.msra.mxu0 0.0
      %1554 = vmatprep.subr.mxu0 0.0
      %1555 = vmatpush1.msra.mxu0 0.0
      %1556 = vmatprep.subr.mxu0 0.0
      %1557 = vmatpush1.msra.mxu0 0.0
      %1558 = vmatprep.subr.mxu0 0.0
      %1559 = vmatpush1.msra.mxu0 0.0
      %1560 = vmatprep.subr.mxu0 0.0
      %1561 = vmatpush1.msra.mxu0 0.0
      %1562 = vmatprep.subr.mxu0 0.0
      %1563 = vmatpush1.msra.mxu0 0.0
      %1564 = vmatprep.subr.mxu0 0.0
      %1565 = vmatpush1.msra.mxu0 0.0
      %1566 = vmatprep.subr.mxu0 0.0
      %1567 = vmatpush1.msra.mxu0 0.0
      %1568 = vmatprep.subr.mxu0 0.0
      %1569 = vmatpush1.msra.mxu0 0.0
      %1570 = vmatprep.subr.mxu0 0.0
      %1571 = vmatpush1.msra.mxu0 0.0
      %1572 = vmatprep.subr.mxu0 0.0
      %1573 = vmatpush1.msra.mxu0 0.0
      %1574 = vmatprep.subr.mxu0 0.0
      %1575 = vmatpush1.msra.mxu0 0.0
      %1576 = vmatprep.subr.mxu0 0.0
      %1577 = vmatpush1.msra.mxu0 %v1470
      %1578 = vmatprep.subr.mxu0 0.0
      %1579 = vmatpush1.msra.mxu0 %v1465
      %1580 = vmatprep.subr.mxu0 0.0
      %1581 = vmatpush2.msra.mxu0 0.0
      %1582 = vmatprep.subr.mxu0 0.0
      %1583 = vmatpush2.msra.mxu0 0.0
      %1584 = vmatprep.subr.mxu0 0.0
      %1585 = vmatpush2.msra.mxu0 0.0
      %1586 = vmatprep.subr.mxu0 0.0
      %1587 = vmatpush2.msra.mxu0 0.0
      %1588 = vmatprep.subr.mxu0 0.0
      %1589 = vmatpush2.msra.mxu0 0.0
      %1590 = vmatprep.subr.mxu0 0.0
      %1591 = vmatpush2.msra.mxu0 0.0
      %1592 = vmatprep.subr.mxu0 0.0
      %1593 = vmatpush2.msra.mxu0 0.0
      %1594 = vmatprep.subr.mxu0 0.0
      %1595 = vmatpush2.msra.mxu0 0.0
      %1596 = vmatprep.subr.mxu0 0.0
      %1597 = vmatpush2.msra.mxu0 0.0
      %1598 = vmatprep.subr.mxu0 0.0
      %1599 = vmatpush2.msra.mxu0 0.0
      %1600 = vmatprep.subr.mxu0 0.0
      %1601 = vmatpush2.msra.mxu0 0.0
      %1602 = vmatprep.subr.mxu0 0.0
      %1603 = vmatpush2.msra.mxu0 0.0
      %1604 = vmatprep.subr.mxu0 0.0
      %1605 = vmatpush2.msra.mxu0 0.0
      %1606 = vmatprep.subr.mxu0 0.0
      %1607 = vmatpush2.msra.mxu0 0.0
      %1608 = vmatprep.subr.mxu0 0.0
      %1609 = vmatpush2.msra.mxu0 0.0
      %1610 = vmatprep.subr.mxu0 0.0
      %1611 = vmatpush2.msra.mxu0 0.0
      %1612 = vmatprep.mubr.f32.mxu0 0.0
      %1613 = vmatmul.mubr.f32.gmra.mxu0 %v367
      %v1614 = vpop.f32.mrf.mxu0
      %v1615 = vadd.f32 0.0, %v1614
      %v1616 = vpop.f32.mrf.mxu0
      %1617 = vmatprep.mubr.f32.mxu0 0.0
      %1618 = vmatmul.mubr.f32.gmra.mxu0 %v370
      %v1619 = vpop.f32.mrf.mxu0
      %v1620 = vadd.f32 0.0, %v1619
      %v1621 = vpop.f32.mrf.mxu0
      %1622 = vdwg.mxu0
      %v1623 = vmul.f32 %v1540, 2.0
      %v1624 = vmul.f32 %v1545, 2.0
      %v1625 = vmul.f32 %v1615, 2.0
      %v1626 = vmul.f32 %v1620, 2.0
      %v1627 = vsub.f32 %v1623, %v1319
      %v1628 = vsub.f32 %v1624, %v1320
      %v1629 = vsub.f32 %v1625, %v1321
      %v1630 = vsub.f32 %v1626, %v1322
      %v1631 = vld [vmem:[%s340] sm:$0xff]
      %v1632 = vld [vmem:[%s340 + $0x8] sm:$0xff]
      %v1633 = vld [vmem:[%s340 + $0x10] sm:$0xff]
      %v1634 = vld [vmem:[%s340 + $0x18] sm:$0xff]
      %v1635 = vld [vmem:[%s4] sm:$0xff]
      %v1636 = vld [vmem:[%s4 + $0x8] sm:$0xff]
      %v1637 = vld [vmem:[%s4 + $0x10] sm:$0xff]
      %v1638 = vld [vmem:[%s4 + $0x18] sm:$0xff]
      %v1640 = vsel %vm688, %v1319, 0
      %v1643 = vsel %vm688, %v1320, 0
      %v1646 = vsel %vm688, %v1321, 0
      %v1649 = vsel %vm688, %v1322, 0
      %1651 = vmatprep.subr.mxu0 0.0
      %1652 = vmatpush1.msra.mxu0 0.0
      %1653 = vmatprep.subr.mxu0 0.0
      %1654 = vmatpush1.msra.mxu0 0.0
      %1655 = vmatprep.subr.mxu0 0.0
      %1656 = vmatpush1.msra.mxu0 0.0
      %1657 = vmatprep.subr.mxu0 0.0
      %1658 = vmatpush1.msra.mxu0 0.0
      %1659 = vmatprep.subr.mxu0 0.0
      %1660 = vmatpush1.msra.mxu0 0.0
      %1661 = vmatprep.subr.mxu0 0.0
      %1662 = vmatpush1.msra.mxu0 0.0
      %1663 = vmatprep.subr.mxu0 0.0
      %1664 = vmatpush1.msra.mxu0 0.0
      %1665 = vmatprep.subr.mxu0 0.0
      %1666 = vmatpush1.msra.mxu0 0.0
      %1667 = vmatprep.subr.mxu0 0.0
      %1668 = vmatpush1.msra.mxu0 0.0
      %1669 = vmatprep.subr.mxu0 0.0
      %1670 = vmatpush1.msra.mxu0 0.0
      %1671 = vmatprep.subr.mxu0 0.0
      %1672 = vmatpush1.msra.mxu0 0.0
      %1673 = vmatprep.subr.mxu0 0.0
      %1674 = vmatpush1.msra.mxu0 0.0
      %1675 = vmatprep.subr.mxu0 0.0
      %1676 = vmatpush1.msra.mxu0 %v1638
      %1677 = vmatprep.subr.mxu0 0.0
      %1678 = vmatpush1.msra.mxu0 %v1637
      %1679 = vmatprep.subr.mxu0 0.0
      %1680 = vmatpush1.msra.mxu0 %v1636
      %1681 = vmatprep.subr.mxu0 0.0
      %1682 = vmatpush1.msra.mxu0 %v1635
      %1683 = vmatprep.subr.mxu0 0.0
      %1684 = vmatpush2.msra.mxu0 0.0
      %1685 = vmatprep.subr.mxu0 0.0
      %1686 = vmatpush2.msra.mxu0 0.0
      %1687 = vmatprep.subr.mxu0 0.0
      %1688 = vmatpush2.msra.mxu0 0.0
      %1689 = vmatprep.subr.mxu0 0.0
      %1690 = vmatpush2.msra.mxu0 0.0
      %1691 = vmatprep.subr.mxu0 0.0
      %1692 = vmatpush2.msra.mxu0 0.0
      %1693 = vmatprep.subr.mxu0 0.0
      %1694 = vmatpush2.msra.mxu0 0.0
      %1695 = vmatprep.subr.mxu0 0.0
      %1696 = vmatpush2.msra.mxu0 0.0
      %1697 = vmatprep.subr.mxu0 0.0
      %1698 = vmatpush2.msra.mxu0 0.0
      %1699 = vmatprep.subr.mxu0 0.0
      %1700 = vmatpush2.msra.mxu0 0.0
      %1701 = vmatprep.subr.mxu0 0.0
      %1702 = vmatpush2.msra.mxu0 0.0
      %1703 = vmatprep.subr.mxu0 0.0
      %1704 = vmatpush2.msra.mxu0 0.0
      %1705 = vmatprep.subr.mxu0 0.0
      %1706 = vmatpush2.msra.mxu0 0.0
      %1707 = vmatprep.subr.mxu0 0.0
      %1708 = vmatpush2.msra.mxu0 0.0
      %1709 = vmatprep.subr.mxu0 0.0
      %1710 = vmatpush2.msra.mxu0 0.0
      %1711 = vmatprep.subr.mxu0 0.0
      %1712 = vmatpush2.msra.mxu0 0.0
      %1713 = vmatprep.subr.mxu0 0.0
      %1714 = vmatpush2.msra.mxu0 0.0
      %1715 = vmatprep.mubr.f32.mxu0 0.0
      %1716 = vmatmul.mubr.f32.gmra.mxu0 %v1640
      %v1717 = vpop.f32.mrf.mxu0
      %v1718 = vadd.f32 0.0, %v1717
      %v1719 = vpop.f32.mrf.mxu0
      %1720 = vmatprep.mubr.f32.mxu0 0.0
      %1721 = vmatmul.mubr.f32.gmra.mxu0 %v1643
      %v1722 = vpop.f32.mrf.mxu0
      %v1723 = vadd.f32 0.0, %v1722
      %v1724 = vpop.f32.mrf.mxu0
      %1725 = vmatprep.mubr.f32.mxu0 0.0
      %1726 = vmatmul.mubr.f32.gmra.mxu0 %v1646
      %v1727 = vpop.f32.mrf.mxu0
      %v1728 = vadd.f32 0.0, %v1727
      %v1729 = vpop.f32.mrf.mxu0
      %1730 = vmatprep.mubr.f32.mxu0 0.0
      %1731 = vmatmul.mubr.f32.gmra.mxu0 %v1649
      %v1732 = vpop.f32.mrf.mxu0
      %v1733 = vadd.f32 0.0, %v1732
      %v1734 = vpop.f32.mrf.mxu0
      %1735 = vdwg.mxu0
      %v1736 = vadd.f32 %v1631, %v1718
      %v1737 = vadd.f32 %v1632, %v1723
      %v1738 = vadd.f32 %v1633, %v1728
      %v1739 = vadd.f32 %v1634, %v1733
      %s1740 = scalar_lea.vmem %s4, 32
      %v1741 = vld [vmem:[%s1740] sm:$0xff]
      %v1742 = vld [vmem:[%s1740 + $0x8] sm:$0xff]
      %v1743 = vld [vmem:[%s1740 + $0x10] sm:$0xff]
      %v1744 = vld [vmem:[%s1740 + $0x18] sm:$0xff]
      %v1746 = vsel %vm688, %v1390, 0
      %v1749 = vsel %vm688, %v1395, 0
      %v1752 = vsel %vm688, %v1465, 0
      %v1755 = vsel %vm688, %v1470, 0
      %1757 = vmatprep.subr.mxu0 0.0
      %1758 = vmatpush1.msra.mxu0 0.0
      %1759 = vmatprep.subr.mxu0 0.0
      %1760 = vmatpush1.msra.mxu0 0.0
      %1761 = vmatprep.subr.mxu0 0.0
      %1762 = vmatpush1.msra.mxu0 0.0
      %1763 = vmatprep.subr.mxu0 0.0
      %1764 = vmatpush1.msra.mxu0 0.0
      %1765 = vmatprep.subr.mxu0 0.0
      %1766 = vmatpush1.msra.mxu0 0.0
      %1767 = vmatprep.subr.mxu0 0.0
      %1768 = vmatpush1.msra.mxu0 0.0
      %1769 = vmatprep.subr.mxu0 0.0
      %1770 = vmatpush1.msra.mxu0 0.0
      %1771 = vmatprep.subr.mxu0 0.0
      %1772 = vmatpush1.msra.mxu0 0.0
      %1773 = vmatprep.subr.mxu0 0.0
      %1774 = vmatpush1.msra.mxu0 0.0
      %1775 = vmatprep.subr.mxu0 0.0
      %1776 = vmatpush1.msra.mxu0 0.0
      %1777 = vmatprep.subr.mxu0 0.0
      %1778 = vmatpush1.msra.mxu0 0.0
      %1779 = vmatprep.subr.mxu0 0.0
      %1780 = vmatpush1.msra.mxu0 0.0
      %1781 = vmatprep.subr.mxu0 0.0
      %1782 = vmatpush1.msra.mxu0 %v1744
      %1783 = vmatprep.subr.mxu0 0.0
      %1784 = vmatpush1.msra.mxu0 %v1743
      %1785 = vmatprep.subr.mxu0 0.0
      %1786 = vmatpush1.msra.mxu0 %v1742
      %1787 = vmatprep.subr.mxu0 0.0
      %1788 = vmatpush1.msra.mxu0 %v1741
      %1789 = vmatprep.subr.mxu0 0.0
      %1790 = vmatpush2.msra.mxu0 0.0
      %1791 = vmatprep.subr.mxu0 0.0
      %1792 = vmatpush2.msra.mxu0 0.0
      %1793 = vmatprep.subr.mxu0 0.0
      %1794 = vmatpush2.msra.mxu0 0.0
      %1795 = vmatprep.subr.mxu0 0.0
      %1796 = vmatpush2.msra.mxu0 0.0
      %1797 = vmatprep.subr.mxu0 0.0
      %1798 = vmatpush2.msra.mxu0 0.0
      %1799 = vmatprep.subr.mxu0 0.0
      %1800 = vmatpush2.msra.mxu0 0.0
      %1801 = vmatprep.subr.mxu0 0.0
      %1802 = vmatpush2.msra.mxu0 0.0
      %1803 = vmatprep.subr.mxu0 0.0
      %1804 = vmatpush2.msra.mxu0 0.0
      %1805 = vmatprep.subr.mxu0 0.0
      %1806 = vmatpush2.msra.mxu0 0.0
      %1807 = vmatprep.subr.mxu0 0.0
      %1808 = vmatpush2.msra.mxu0 0.0
      %1809 = vmatprep.subr.mxu0 0.0
      %1810 = vmatpush2.msra.mxu0 0.0
      %1811 = vmatprep.subr.mxu0 0.0
      %1812 = vmatpush2.msra.mxu0 0.0
      %1813 = vmatprep.subr.mxu0 0.0
      %1814 = vmatpush2.msra.mxu0 0.0
      %1815 = vmatprep.subr.mxu0 0.0
      %1816 = vmatpush2.msra.mxu0 0.0
      %1817 = vmatprep.subr.mxu0 0.0
      %1818 = vmatpush2.msra.mxu0 0.0
      %1819 = vmatprep.subr.mxu0 0.0
      %1820 = vmatpush2.msra.mxu0 0.0
      %1821 = vmatprep.mubr.f32.mxu0 0.0
      %1822 = vmatmul.mubr.f32.gmra.mxu0 %v1746
      %v1823 = vpop.f32.mrf.mxu0
      %v1824 = vadd.f32 0.0, %v1823
      %v1825 = vpop.f32.mrf.mxu0
      %1826 = vmatprep.mubr.f32.mxu0 0.0
      %1827 = vmatmul.mubr.f32.gmra.mxu0 %v1749
      %v1828 = vpop.f32.mrf.mxu0
      %v1829 = vadd.f32 0.0, %v1828
      %v1830 = vpop.f32.mrf.mxu0
      %1831 = vmatprep.mubr.f32.mxu0 0.0
      %1832 = vmatmul.mubr.f32.gmra.mxu0 %v1752
      %v1833 = vpop.f32.mrf.mxu0
      %v1834 = vadd.f32 0.0, %v1833
      %v1835 = vpop.f32.mrf.mxu0
      %1836 = vmatprep.mubr.f32.mxu0 0.0
      %1837 = vmatmul.mubr.f32.gmra.mxu0 %v1755
      %v1838 = vpop.f32.mrf.mxu0
      %v1839 = vadd.f32 0.0, %v1838
      %v1840 = vpop.f32.mrf.mxu0
      %1841 = vdwg.mxu0
      %v1842 = vadd.f32 %v1736, %v1824
      %v1843 = vadd.f32 %v1737, %v1829
      %v1844 = vadd.f32 %v1738, %v1834
      %v1845 = vadd.f32 %v1739, %v1839
      %s1846 = scalar_lea.vmem %s4, 64
      %v1847 = vld [vmem:[%s1846] sm:$0xff]
      %v1848 = vld [vmem:[%s1846 + $0x8] sm:$0xff]
      %v1849 = vld [vmem:[%s1846 + $0x10] sm:$0xff]
      %v1850 = vld [vmem:[%s1846 + $0x18] sm:$0xff]
      %v1852 = vsel %vm688, %v1627, 0
      %v1855 = vsel %vm688, %v1628, 0
      %v1858 = vsel %vm688, %v1629, 0
      %v1861 = vsel %vm688, %v1630, 0
      %1863 = vmatprep.subr.mxu0 0.0
      %1864 = vmatpush1.msra.mxu0 0.0
      %1865 = vmatprep.subr.mxu0 0.0
      %1866 = vmatpush1.msra.mxu0 0.0
      %1867 = vmatprep.subr.mxu0 0.0
      %1868 = vmatpush1.msra.mxu0 0.0
      %1869 = vmatprep.subr.mxu0 0.0
      %1870 = vmatpush1.msra.mxu0 0.0
      %1871 = vmatprep.subr.mxu0 0.0
      %1872 = vmatpush1.msra.mxu0 0.0
      %1873 = vmatprep.subr.mxu0 0.0
      %1874 = vmatpush1.msra.mxu0 0.0
      %1875 = vmatprep.subr.mxu0 0.0
      %1876 = vmatpush1.msra.mxu0 0.0
      %1877 = vmatprep.subr.mxu0 0.0
      %1878 = vmatpush1.msra.mxu0 0.0
      %1879 = vmatprep.subr.mxu0 0.0
      %1880 = vmatpush1.msra.mxu0 0.0
      %1881 = vmatprep.subr.mxu0 0.0
      %1882 = vmatpush1.msra.mxu0 0.0
      %1883 = vmatprep.subr.mxu0 0.0
      %1884 = vmatpush1.msra.mxu0 0.0
      %1885 = vmatprep.subr.mxu0 0.0
      %1886 = vmatpush1.msra.mxu0 0.0
      %1887 = vmatprep.subr.mxu0 0.0
      %1888 = vmatpush1.msra.mxu0 %v1850
      %1889 = vmatprep.subr.mxu0 0.0
      %1890 = vmatpush1.msra.mxu0 %v1849
      %1891 = vmatprep.subr.mxu0 0.0
      %1892 = vmatpush1.msra.mxu0 %v1848
      %1893 = vmatprep.subr.mxu0 0.0
      %1894 = vmatpush1.msra.mxu0 %v1847
      %1895 = vmatprep.subr.mxu0 0.0
      %1896 = vmatpush2.msra.mxu0 0.0
      %1897 = vmatprep.subr.mxu0 0.0
      %1898 = vmatpush2.msra.mxu0 0.0
      %1899 = vmatprep.subr.mxu0 0.0
      %1900 = vmatpush2.msra.mxu0 0.0
      %1901 = vmatprep.subr.mxu0 0.0
      %1902 = vmatpush2.msra.mxu0 0.0
      %1903 = vmatprep.subr.mxu0 0.0
      %1904 = vmatpush2.msra.mxu0 0.0
      %1905 = vmatprep.subr.mxu0 0.0
      %1906 = vmatpush2.msra.mxu0 0.0
      %1907 = vmatprep.subr.mxu0 0.0
      %1908 = vmatpush2.msra.mxu0 0.0
      %1909 = vmatprep.subr.mxu0 0.0
      %1910 = vmatpush2.msra.mxu0 0.0
      %1911 = vmatprep.subr.mxu0 0.0
      %1912 = vmatpush2.msra.mxu0 0.0
      %1913 = vmatprep.subr.mxu0 0.0
      %1914 = vmatpush2.msra.mxu0 0.0
      %1915 = vmatprep.subr.mxu0 0.0
      %1916 = vmatpush2.msra.mxu0 0.0
      %1917 = vmatprep.subr.mxu0 0.0
      %1918 = vmatpush2.msra.mxu0 0.0
      %1919 = vmatprep.subr.mxu0 0.0
      %1920 = vmatpush2.msra.mxu0 0.0
      %1921 = vmatprep.subr.mxu0 0.0
      %1922 = vmatpush2.msra.mxu0 0.0
      %1923 = vmatprep.subr.mxu0 0.0
      %1924 = vmatpush2.msra.mxu0 0.0
      %1925 = vmatprep.subr.mxu0 0.0
      %1926 = vmatpush2.msra.mxu0 0.0
      %1927 = vmatprep.mubr.f32.mxu0 0.0
      %1928 = vmatmul.mubr.f32.gmra.mxu0 %v1852
      %v1929 = vpop.f32.mrf.mxu0
      %v1930 = vadd.f32 0.0, %v1929
      %v1931 = vpop.f32.mrf.mxu0
      %1932 = vmatprep.mubr.f32.mxu0 0.0
      %1933 = vmatmul.mubr.f32.gmra.mxu0 %v1855
      %v1934 = vpop.f32.mrf.mxu0
      %v1935 = vadd.f32 0.0, %v1934
      %v1936 = vpop.f32.mrf.mxu0
      %1937 = vmatprep.mubr.f32.mxu0 0.0
      %1938 = vmatmul.mubr.f32.gmra.mxu0 %v1858
      %v1939 = vpop.f32.mrf.mxu0
      %v1940 = vadd.f32 0.0, %v1939
      %v1941 = vpop.f32.mrf.mxu0
      %1942 = vmatprep.mubr.f32.mxu0 0.0
      %1943 = vmatmul.mubr.f32.gmra.mxu0 %v1861
      %v1944 = vpop.f32.mrf.mxu0
      %v1945 = vadd.f32 0.0, %v1944
      %v1946 = vpop.f32.mrf.mxu0
      %1947 = vdwg.mxu0
      %v1948 = vadd.f32 %v1842, %v1930
      %v1949 = vadd.f32 %v1843, %v1935
      %v1950 = vadd.f32 %v1844, %v1940
      %v1951 = vadd.f32 %v1845, %v1945
      %v1952 = vtanh.pop %v1948
      %v1953 = vtanh.pop %v1949
      %v1954 = vtanh.pop %v1950
      %v1955 = vtanh.pop %v1951
      %v1956 = vmul.f32 %v1315, %v361
      %v1957 = vmul.f32 %v1316, %v362
      %v1958 = vmul.f32 %v1317, %v363
      %v1959 = vmul.f32 %v1318, %v364
      %v1960 = vsub.f32 1.0, %v1315
      %v1961 = vsub.f32 1.0, %v1316
      %v1962 = vsub.f32 1.0, %v1317
      %v1963 = vsub.f32 1.0, %v1318
      %v1964 = vmul.f32 %v1960, %v1952
      %v1965 = vmul.f32 %v1961, %v1953
      %v1966 = vmul.f32 %v1962, %v1954
      %v1967 = vmul.f32 %v1963, %v1955
      %v1968 = vadd.f32 %v1956, %v1964
      %v1969 = vadd.f32 %v1957, %v1965
      %v1970 = vadd.f32 %v1958, %v1966
      %v1971 = vadd.f32 %v1959, %v1967
      %1972 = vst.msk [vmem:[#allocation2] sm:$0xff] %vm688, %v1968
      %1973 = vst.msk [vmem:[#allocation2 + $0x8] sm:$0xff] %vm688, %v1969
      %1974 = vst.msk [vmem:[#allocation2 + $0x10] sm:$0xff] %vm688, %v1970
      %1975 = vst.msk [vmem:[#allocation2 + $0x18] sm:$0xff] %vm688, %v1971
      %1976 = vst.msk [vmem:[%s345] sm:$0xff] %vm688, %v1968
      %1977 = vst.msk [vmem:[%s345 + $0x8] sm:$0xff] %vm688, %v1969
      %1978 = vst.msk [vmem:[%s345 + $0x10] sm:$0xff] %vm688, %v1970
      %1979 = vst.msk [vmem:[%s345 + $0x18] sm:$0xff] %vm688, %v1971
      %p1980 = scmp.lt.s32.totalorder %s19, 7
      %s1981 = scalar_select %p1980, %s19, 7
      %s1982 = smul.addr %s1981, 4
      %s1983 = smul.addr %s1982, 8
      %s1984 = scalar_lea.vmem %s8, %s1983
      // Predicated region
      $region57: #{fagru_sequence.1} parent=51 // pred_check
        %p1985 = pneg %p220
      $region58: #{fagru_sequence.1} parent=51 // pred_check_branch
        %1987 = sbr.rel (%p1985) target = $region60
      $region59: #{fagru_sequence.1} parent=51 // pred_region
        _
      $region60: #{fagru_sequence.1} parent=51 // pred_fallthru
        _
    $region52: #{fagru_sequence.1} parent=5 // pred_fallthru
      _
    %p1988 = scmp.le.s32.totalorder 2, %s14
    // Predicated region
    $region61: #{fagru_sequence.1} parent=5 // pred_check
      %p1989 = pneg %p1988
    $region62: #{fagru_sequence.1} parent=5 // pred_check_branch
      %1991 = sbr.rel (%p1989) target = $region64
    $region63: #{fagru_sequence.1} parent=5 // pred_region
      %s1992 = ssub.s32 %s14, 2
      // Predicated region
      $region65: #{fagru_sequence.1} parent=63 // pred_check
        %p1993 = pneg %p226
      $region66: #{fagru_sequence.1} parent=63 // pred_check_branch
        %1995 = sbr.rel (%p1993) target = $region68
      $region67: #{fagru_sequence.1} parent=63 // pred_region
        %p1996 = scmp.lt.s32.totalorder %s20, 7
        %s1997 = scalar_select %p1996, %s20, 7
        %s1998 = smul.addr %s1997, 4
        %s1999 = smul.addr %s1998, 8
        %s2000 = scalar_lea.vmem %s8, %s1999
      $region68: #{fagru_sequence.1} parent=63 // pred_fallthru
        _
    $region64: #{fagru_sequence.1} parent=5 // pred_fallthru
      _
  $region6: #{fagru_sequence.1} parent=0 // loop_footer
    %s18 = sadd.s32 1, %s14
  $region7: #{fagru_sequence.1} parent=0 // loop_footer_branch
    %13 = sbr.rel target = $region3
  $region8: #{fagru_sequence.1} parent=0 // loop_exit
    _

</llo_original>
